<compile_context>
chip_gen: v7x
topology: tpu7x:2x2x1
jax: 0.10.0
libtpu: 0.0.40
codegen_flags: <defaults>
</compile_context>

<pallas_src>
import jax
import jax.numpy as jnp
from jax import lax
from jax.experimental import pallas as pl
from jax.experimental.pallas import tpu as pltpu


def attention_kernel(enc_ref, dec_ref,
                     we_ref, be_ref,
                     wd_ref, bd_ref,
                     wf_ref, bf_ref,
                     alpha_ref, weighted_ref):
    # enc_ref : (TB, N, E) bf16   dec_ref : (TB, D) f32
    tb, n, _ = enc_ref.shape

    enc = enc_ref[...]                                            # (TB, N, E) bf16

    # encoder_att: one MXU push with M = TB*N, contracting E directly on the 3-D
    # block (no reshape -> no VMEM copy when N is not 8-aligned).
    att1 = lax.dot_general(
        enc, we_ref[...],
        dimension_numbers=(((2,), (0,)), ((), ())),
        preferred_element_type=jnp.float32) + be_ref[...]         # (TB, N, A) f32

    # decoder_att: tiny matmul for the whole TB block; dec stays f32 in HBM and is
    # cast to bf16 only for the MXU operand.
    att2 = jnp.dot(dec_ref[...].astype(we_ref.dtype), wd_ref[...],
                   preferred_element_type=jnp.float32) + bd_ref[...]   # (TB, A)

    h = jnp.maximum(att1 + att2[:, None, :], 0.0)                 # (TB, N, A) f32

    # full_att (A -> 1) as VPU mul + lane reduce (a rank-1 MXU push would idle the
    # systolic array); scalar bias read from SMEM.
    e_scores = jnp.sum(h * wf_ref[...], axis=-1) + bf_ref[0, 0]   # (TB, N), N on lanes

    # softmax over the N positions (lane axis); alpha already in output layout.
    m = jnp.max(e_scores, axis=-1, keepdims=True)                 # (TB, 1)
    p = jnp.exp(e_scores - m)                                     # (TB, N)
    denom = jnp.sum(p, axis=-1, keepdims=True)                    # (TB, 1)
    inv = pl.reciprocal(denom, approx=True)                       # EUP slot
    inv = inv * (2.0 - denom * inv)                               # Newton step -> f32 accuracy
    alpha = p * inv                                               # (TB, N) f32

    # lane-dense store: alpha_ref is padded to a multiple of 128 lanes.
    n_out = alpha_ref.shape[1]
    if n_out != n:
        alpha_store = jnp.concatenate(
            [alpha, jnp.zeros((tb, n_out - n), alpha.dtype)], axis=-1)
    else:
        alpha_store = alpha
    alpha_ref[...] = alpha_store.astype(alpha_ref.dtype)

    # weighted = sum_n alpha[b, n] * enc[b, n, :]  (VPU mul + sublane-tree reduce,
    # kept in f32).
    weighted = jnp.sum(enc.astype(jnp.float32) * alpha[:, :, None], axis=1)   # (TB, E)
    weighted_ref[...] = weighted.astype(weighted_ref.dtype)


def _round_up(x, m):
    return (x + m - 1) // m * m


def _vmem_bytes_estimate(tb, n, n_pad, e, d, a):
    bf16, f32 = 2, 4
    return (2 * tb * n * e * bf16          # encoder block, double-buffered
            + 2 * tb * d * f32             # decoder block, double-buffered
            + (e * a + d * a) * bf16       # W_enc / W_dec, single-buffered
            + 3 * a * f32                  # b_enc / b_dec / w_full
            + 2 * tb * (n_pad + e) * f32   # alpha / weighted output blocks
            + 3 * tb * n * a * f32         # att1 / h live intermediates
            + tb * n * e * f32)            # f32 upcast of enc for `weighted`


def attention_forward(encoder_out, decoder_hidden, params, *, tb=8):
    """encoder_out: (B, N, E), decoder_hidden: (B, D) -> (alpha (B,N), weighted (B,E))."""
    if encoder_out.ndim != 3:
        encoder_out = encoder_out[None]
    if decoder_hidden.ndim != 2:
        decoder_hidden = decoder_hidden[None]

    B, N, E = encoder_out.shape
    D = decoder_hidden.shape[1]
    we, be, wd, bd, wf, bf = params
    A = we.shape[1]

    # alpha output padded to a lane multiple so its store is unmasked.
    Np = _round_up(N, 128)

    # TB must be a multiple of 8 (sublane alignment); shrink toward 8 if the
    # per-step VMEM estimate exceeds a budget that is safe on v7x (64 MiB VMEM).
    VMEM_BUDGET = 48 * 2**20
    tb = max(8, (tb // 8) * 8)
    while tb > 8 and _vmem_bytes_estimate(tb, N, Np, E, D, A) > VMEM_BUDGET:
        tb -= 8

    pad = (-B) % tb
    Bp = B + pad

    # bf16 on the HBM/MXU path; everything else stays f32.
    enc_in = encoder_out.astype(jnp.bfloat16)
    dec_in = decoder_hidden.astype(jnp.float32)
    we_in = we.astype(jnp.bfloat16)
    wd_in = wd.astype(jnp.bfloat16)
    be_in = be.astype(jnp.float32)
    bd_in = bd.astype(jnp.float32)
    wf_in = wf.astype(jnp.float32)
    bf_in = bf.astype(jnp.float32)

    if pad:
        enc_in = jnp.pad(enc_in, ((0, pad), (0, 0), (0, 0)))
        dec_in = jnp.pad(dec_in, ((0, pad), (0, 0)))

    vmem_limit = int(min(max(2 * _vmem_bytes_estimate(tb, N, Np, E, D, A),
                             32 * 2**20), 56 * 2**20))

    bcast = dict(pipeline_mode=pl.Buffered(1))   # constant blocks: single buffer

    alpha, weighted = pl.pallas_call(
        attention_kernel,
        out_shape=(
            jax.ShapeDtypeStruct((Bp, Np), jnp.float32),
            jax.ShapeDtypeStruct((Bp, E), jnp.float32),
        ),
        grid_spec=pltpu.PrefetchScalarGridSpec(
            num_scalar_prefetch=0,
            grid=(Bp // tb,),
            in_specs=[
                pl.BlockSpec((tb, N, E), lambda b: (b, 0, 0)),        # encoder_out block (bf16)
                pl.BlockSpec((tb, D),    lambda b: (b, 0)),           # decoder_hidden block (f32)
                pl.BlockSpec((E, A),     lambda b: (0, 0), **bcast),  # W_enc^T
                pl.BlockSpec((1, A),     lambda b: (0, 0), **bcast),  # b_enc
                pl.BlockSpec((D, A),     lambda b: (0, 0), **bcast),  # W_dec^T
                pl.BlockSpec((1, A),     lambda b: (0, 0), **bcast),  # b_dec
                pl.BlockSpec((1, A),     lambda b: (0, 0), **bcast),  # W_full row (lane-major)
                pl.BlockSpec(memory_space=pltpu.MemorySpace.SMEM),    # b_full scalar in SMEM
            ],
            out_specs=[
                pl.BlockSpec((tb, Np), lambda b: (b, 0)),             # alpha (lane-dense)
                pl.BlockSpec((tb, E),  lambda b: (b, 0)),             # weighted (lane-dense)
            ],
        ),
        compiler_params=pltpu.CompilerParams(
            dimension_semantics=("parallel",),
            vmem_limit_bytes=vmem_limit),
    )(enc_in, dec_in, we_in, be_in, wd_in, bd_in, wf_in, bf_in)

    return alpha[:B, :N], weighted[:B]


def init_params(key, encoder_dim, decoder_dim, attention_dim):
    """Deterministic init matching nn.Linear parameter shapes.
    Weights stored already-transposed for the x @ W^T convention; full_att
    weight stored as a lane-major row (1, A); its bias as a (1, 1) SMEM scalar."""
    k1, k2, k3, k4, k5, k6 = jax.random.split(key, 6)
    we = jax.random.normal(k1, (encoder_dim, attention_dim), jnp.float32) * 0.1
    be = jax.random.normal(k2, (1, attention_dim), jnp.float32) * 0.1
    wd = jax.random.normal(k3, (decoder_dim, attention_dim), jnp.float32) * 0.1
    bd = jax.random.normal(k4, (1, attention_dim), jnp.float32) * 0.1
    wf = jax.random.normal(k5, (1, attention_dim), jnp.float32) * 0.1    # row vector
    bf = jax.random.normal(k6, (1, 1), jnp.float32) * 0.1
    return (we, be, wd, bd, wf, bf)


def reference_forward(encoder_out, decoder_hidden, params):
    """Pure-JAX reference mirroring the kernel's numerics: the HBM/MXU-path
    operands are rounded to bf16 (exactly what the kernel sees), math in f32."""
    we, be, wd, bd, wf, bf = params
    enc = encoder_out.astype(jnp.bfloat16).astype(jnp.float32)
    dec = decoder_hidden.astype(jnp.bfloat16).astype(jnp.float32)
    we_ = we.astype(jnp.bfloat16).astype(jnp.float32)
    wd_ = wd.astype(jnp.bfloat16).astype(jnp.float32)
    att1 = enc @ we_ + be[0]                                      # (B, N, A)
    att2 = dec @ wd_ + bd[0]                                      # (B, A)
    h = jnp.maximum(att1 + att2[:, None, :], 0.0)                 # (B, N, A)
    e = jnp.sum(h * wf[0], axis=-1) + bf[0, 0]                    # (B, N)
    alpha = jax.nn.softmax(e, axis=1)                             # (B, N)
    weighted = jnp.sum(enc * alpha[..., None], axis=1)            # (B, E)
    return alpha, weighted


if __name__ == "__main__":
    # Small, lane-friendly shapes: E and A are 128-aligned so the dominant matmul
    # and the `weighted` store are lane-dense; B=16 with TB=8 gives a 2-step grid
    # (sublane-aligned blocks, both v7x TensorCores busy).
    B, N = 16, 16           # batch, number of encoder positions
    E, D, A = 128, 64, 128  # encoder_dim, decoder_dim, attention_dim
    TB = 8

    key = jax.random.PRNGKey(0)
    k_enc, k_dec, k_par = jax.random.split(key, 3)

    encoder_out = jax.random.normal(k_enc, (B, N, E), jnp.float32)
    decoder_hidden = jax.random.normal(k_dec, (B, D), jnp.float32)
    params = init_params(k_par, E, D, A)

    alpha, weighted = attention_forward(encoder_out, decoder_hidden, params, tb=TB)
    jax.block_until_ready((alpha, weighted))

    # correctness check against a pure-JAX reference (same bf16-rounded operands)
    alpha_ref, weighted_ref = reference_forward(encoder_out, decoder_hidden, params)
    assert alpha.shape == (B, N) and weighted.shape == (B, E)
    assert jnp.allclose(alpha, alpha_ref, atol=1e-3, rtol=1e-3)
    assert jnp.allclose(weighted, weighted_ref, atol=1e-3, rtol=1e-3)

    print("KERNEL_OK")
</pallas_src>

<mosaic_0001>
module attributes {stable_mosaic.version = 11 : i64} {
  func.func @attention_kernel(%arg0: i32, %arg1: memref<8x16x128xbf16, #tpu.memory_space<vmem>>, %arg2: memref<8x64xf32, #tpu.memory_space<vmem>>, %arg3: memref<128x128xbf16, #tpu.memory_space<vmem>>, %arg4: memref<1x128xf32, #tpu.memory_space<vmem>>, %arg5: memref<64x128xbf16, #tpu.memory_space<vmem>>, %arg6: memref<1x128xf32, #tpu.memory_space<vmem>>, %arg7: memref<1x128xf32, #tpu.memory_space<vmem>>, %arg8: memref<1x1xf32, #tpu.memory_space<smem>>, %arg9: memref<8x128xf32, #tpu.memory_space<vmem>>, %arg10: memref<8x128xf32, #tpu.memory_space<vmem>>) attributes {dimension_semantics = [#tpu.dimension_semantics<parallel>], iteration_bounds = array<i64: 2>, scalar_prefetch = 0 : i64, scratch_operands = 0 : i64, tpu.core_type = #tpu.core_type<tc>, window_params = [{transform_indices = @transform_0, window_bounds = array<i64: 8, 16, 128>}, {transform_indices = @transform_1, window_bounds = array<i64: 8, 64>}, {pipeline_mode = #tpu.pipeline_mode<synchronous>, transform_indices = @transform_2, window_bounds = array<i64: 128, 128>}, {pipeline_mode = #tpu.pipeline_mode<synchronous>, transform_indices = @transform_3, window_bounds = array<i64: 1, 128>}, {pipeline_mode = #tpu.pipeline_mode<synchronous>, transform_indices = @transform_4, window_bounds = array<i64: 64, 128>}, {pipeline_mode = #tpu.pipeline_mode<synchronous>, transform_indices = @transform_5, window_bounds = array<i64: 1, 128>}, {pipeline_mode = #tpu.pipeline_mode<synchronous>, transform_indices = @transform_6, window_bounds = array<i64: 1, 128>}, {transform_indices = @transform_7, window_bounds = array<i64: 1, 1>}, {transform_indices = @transform_8, window_bounds = array<i64: 8, 128>}, {transform_indices = @transform_9, window_bounds = array<i64: 8, 128>}]} {
    %c0 = arith.constant 0 : index
    %c0_0 = arith.constant 0 : index
    %c0_1 = arith.constant 0 : index
    %0 = vector.load %arg1[%c0, %c0_0, %c0_1] : memref<8x16x128xbf16, #tpu.memory_space<vmem>>, vector<8x16x128xbf16>
    %c0_2 = arith.constant 0 : index
    %c0_3 = arith.constant 0 : index
    %1 = vector.load %arg3[%c0_2, %c0_3] : memref<128x128xbf16, #tpu.memory_space<vmem>>, vector<128x128xbf16>
    %cst = arith.constant dense<0.000000e+00> : vector<8x16x128xf32>
    %2 = tpu.matmul %0, %1, %cst {dimension_numbers = #tpu.dot_dimension_numbers<[2], [0], [0, 1], [1], [0, 0, 0, 1, 1, 1], [], []>} : vector<8x16x128xbf16>, vector<128x128xbf16>, vector<8x16x128xf32> -> vector<8x16x128xf32>
    %c0_4 = arith.constant 0 : index
    %c0_5 = arith.constant 0 : index
    %3 = vector.load %arg4[%c0_4, %c0_5] : memref<1x128xf32, #tpu.memory_space<vmem>>, vector<1x128xf32>
    %4 = vector.shape_cast %3 : vector<1x128xf32> to vector<1x1x128xf32>
    %5 = vector.broadcast %4 : vector<1x1x128xf32> to vector<8x16x128xf32>
    %6 = arith.addf %2, %5 : vector<8x16x128xf32>
    %c0_6 = arith.constant 0 : index
    %c0_7 = arith.constant 0 : index
    %7 = vector.load %arg2[%c0_6, %c0_7] : memref<8x64xf32, #tpu.memory_space<vmem>>, vector<8x64xf32>
    %8 = arith.truncf %7 : vector<8x64xf32> to vector<8x64xbf16>
    %c0_8 = arith.constant 0 : index
    %c0_9 = arith.constant 0 : index
    %9 = vector.load %arg5[%c0_8, %c0_9] : memref<64x128xbf16, #tpu.memory_space<vmem>>, vector<64x128xbf16>
    %cst_10 = arith.constant dense<0.000000e+00> : vector<8x128xf32>
    %10 = tpu.matmul %8, %9, %cst_10 {dimension_numbers = #tpu.dot_dimension_numbers<[1], [0], [0], [1], [0, 0, 1, 1], [], []>} : vector<8x64xbf16>, vector<64x128xbf16>, vector<8x128xf32> -> vector<8x128xf32>
    %c0_11 = arith.constant 0 : index
    %c0_12 = arith.constant 0 : index
    %11 = vector.load %arg6[%c0_11, %c0_12] : memref<1x128xf32, #tpu.memory_space<vmem>>, vector<1x128xf32>
    %12 = vector.broadcast %11 : vector<1x128xf32> to vector<8x128xf32>
    %13 = arith.addf %10, %12 : vector<8x128xf32>
    %14 = vector.shape_cast %13 : vector<8x128xf32> to vector<8x1x128xf32>
    %15 = vector.broadcast %14 : vector<8x1x128xf32> to vector<8x16x128xf32>
    %16 = arith.addf %6, %15 : vector<8x16x128xf32>
    %cst_13 = arith.constant 0.000000e+00 : f32
    %17 = vector.broadcast %cst_13 : f32 to vector<8x16x128xf32>
    %18 = arith.maximumf %16, %17 : vector<8x16x128xf32>
    %c0_14 = arith.constant 0 : index
    %c0_15 = arith.constant 0 : index
    %19 = vector.load %arg7[%c0_14, %c0_15] : memref<1x128xf32, #tpu.memory_space<vmem>>, vector<1x128xf32>
    %20 = vector.shape_cast %19 : vector<1x128xf32> to vector<1x1x128xf32>
    %21 = vector.broadcast %20 : vector<1x1x128xf32> to vector<8x16x128xf32>
    %22 = arith.mulf %18, %21 : vector<8x16x128xf32>
    %cst_16 = arith.constant dense<0.000000e+00> : vector<8x16xf32>
    %23 = vector.multi_reduction <add>, %22, %cst_16 [2] : vector<8x16x128xf32> to vector<8x16xf32>
    %c0_17 = arith.constant 0 : index
    %c0_18 = arith.constant 0 : index
    %24 = memref.load %arg8[%c0_17, %c0_18] : memref<1x1xf32, #tpu.memory_space<smem>>
    %25 = vector.broadcast %24 : f32 to vector<8x16xf32>
    %26 = arith.addf %23, %25 : vector<8x16xf32>
    %cst_19 = arith.constant dense<0xFF800000> : vector<8xf32>
    %27 = vector.multi_reduction <maximumf>, %26, %cst_19 [1] : vector<8x16xf32> to vector<8xf32>
    %28 = vector.shape_cast %27 : vector<8xf32> to vector<8x1xf32>
    %29 = vector.broadcast %28 : vector<8x1xf32> to vector<8x16xf32>
    %30 = arith.subf %26, %29 : vector<8x16xf32>
    %31 = math.exp %30 : vector<8x16xf32>
    %cst_20 = arith.constant dense<0.000000e+00> : vector<8xf32>
    %32 = vector.multi_reduction <add>, %31, %cst_20 [1] : vector<8x16xf32> to vector<8xf32>
    %33 = vector.shape_cast %32 : vector<8xf32> to vector<8x1xf32>
    %34 = tpu.reciprocal %33 {approx = true} : vector<8x1xf32> -> vector<8x1xf32>
    %35 = arith.mulf %33, %34 : vector<8x1xf32>
    %cst_21 = arith.constant 2.000000e+00 : f32
    %36 = vector.broadcast %cst_21 : f32 to vector<8x1xf32>
    %37 = arith.subf %36, %35 : vector<8x1xf32>
    %38 = arith.mulf %34, %37 : vector<8x1xf32>
    %39 = vector.broadcast %38 : vector<8x1xf32> to vector<8x16xf32>
    %40 = arith.mulf %31, %39 : vector<8x16xf32>
    %cst_22 = arith.constant 0.000000e+00 : f32
    %41 = vector.broadcast %cst_22 : f32 to vector<8x112xf32>
    %42 = tpu.concatenate %40, %41 in 1 : vector<8x16xf32>, vector<8x112xf32> -> vector<8x128xf32>
    %c0_23 = arith.constant 0 : index
    %c0_24 = arith.constant 0 : index
    %43 = vector.load %arg9[%c0_23, %c0_24] : memref<8x128xf32, #tpu.memory_space<vmem>>, vector<8x128xf32>
    tpu.vector_store %arg9[%c0_23, %c0_24], %42 {strides = array<i32>} : memref<8x128xf32, #tpu.memory_space<vmem>>, vector<8x128xf32>,
    %44 = arith.extf %0 : vector<8x16x128xbf16> to vector<8x16x128xf32>
    %45 = vector.shape_cast %40 : vector<8x16xf32> to vector<8x16x1xf32>
    %46 = vector.broadcast %45 : vector<8x16x1xf32> to vector<8x16x128xf32>
    %47 = arith.mulf %44, %46 : vector<8x16x128xf32>
    %cst_25 = arith.constant dense<0.000000e+00> : vector<8x128xf32>
    %48 = vector.multi_reduction <add>, %47, %cst_25 [1] : vector<8x16x128xf32> to vector<8x128xf32>
    %c0_26 = arith.constant 0 : index
    %c0_27 = arith.constant 0 : index
    %49 = vector.load %arg10[%c0_26, %c0_27] : memref<8x128xf32, #tpu.memory_space<vmem>>, vector<8x128xf32>
    tpu.vector_store %arg10[%c0_26, %c0_27], %48 {strides = array<i32>} : memref<8x128xf32, #tpu.memory_space<vmem>>, vector<8x128xf32>,
    return
  }
  func.func @transform_0(%arg0: i32) -> (i32, i32, i32) {
    %c0_i32 = arith.constant 0 : i32
    %c0_i32_0 = arith.constant 0 : i32
    %c0_i32_1 = arith.constant 0 : i32
    return %arg0, %c0_i32, %c0_i32_0 : i32, i32, i32
  }
  func.func @transform_1(%arg0: i32) -> (i32, i32) {
    %c0_i32 = arith.constant 0 : i32
    %c0_i32_0 = arith.constant 0 : i32
    return %arg0, %c0_i32 : i32, i32
  }
  func.func @transform_2(%arg0: i32) -> (i32, i32) {
    %c0_i32 = arith.constant 0 : i32
    %c0_i32_0 = arith.constant 0 : i32
    %c0_i32_1 = arith.constant 0 : i32
    return %c0_i32, %c0_i32_0 : i32, i32
  }
  func.func @transform_3(%arg0: i32) -> (i32, i32) {
    %c0_i32 = arith.constant 0 : i32
    %c0_i32_0 = arith.constant 0 : i32
    %c0_i32_1 = arith.constant 0 : i32
    return %c0_i32, %c0_i32_0 : i32, i32
  }
  func.func @transform_4(%arg0: i32) -> (i32, i32) {
    %c0_i32 = arith.constant 0 : i32
    %c0_i32_0 = arith.constant 0 : i32
    %c0_i32_1 = arith.constant 0 : i32
    return %c0_i32, %c0_i32_0 : i32, i32
  }
  func.func @transform_5(%arg0: i32) -> (i32, i32) {
    %c0_i32 = arith.constant 0 : i32
    %c0_i32_0 = arith.constant 0 : i32
    %c0_i32_1 = arith.constant 0 : i32
    return %c0_i32, %c0_i32_0 : i32, i32
  }
  func.func @transform_6(%arg0: i32) -> (i32, i32) {
    %c0_i32 = arith.constant 0 : i32
    %c0_i32_0 = arith.constant 0 : i32
    %c0_i32_1 = arith.constant 0 : i32
    return %c0_i32, %c0_i32_0 : i32, i32
  }
  func.func @transform_7(%arg0: i32) -> (i32, i32) {
    %c0_i32 = arith.constant 0 : i32
    %c0_i32_0 = arith.constant 0 : i32
    %c0_i32_1 = arith.constant 0 : i32
    return %c0_i32, %c0_i32_0 : i32, i32
  }
  func.func @transform_8(%arg0: i32) -> (i32, i32) {
    %c0_i32 = arith.constant 0 : i32
    %c0_i32_0 = arith.constant 0 : i32
    return %arg0, %c0_i32 : i32, i32
  }
  func.func @transform_9(%arg0: i32) -> (i32, i32) {
    %c0_i32 = arith.constant 0 : i32
    %c0_i32_0 = arith.constant 0 : i32
    return %arg0, %c0_i32 : i32, i32
  }
}

</mosaic_0001>

<llo_original>
// kernel: tpu_custom_call.1
$region0: #{tpu_custom_call.1}
  #allocation0 [shape = 'u32[]', space=smem, size = 0x4, offset = 0x4, fixed_abs, tag = 'smem constant byte address 0x4 - core index']
  #allocation1 [shape = 'u32[144,128]{1,0:T(1,128)}', space=vmem, size = 0x12000, scoped, tag = 'internal scratch']
  #allocation2 [shape = 'f32[1,1]{1,0:T(1,128)S(6)}', space=smem, size = 0x200, scoped, tag = 'scoped memory for tpu_custom_call.1']
  %s0 = inlined_call_operand.hbm [shape: bf16[16,16,128], index: 0, kind: input, shape index: {}]
  %s1 = inlined_call_operand.hbm [shape: f32[16,64], index: 1, kind: input, shape index: {}]
  %s2 = inlined_call_operand.hbm [shape: bf16[128,128], index: 2, kind: input, shape index: {}]
  %s3 = inlined_call_operand.vmem [shape: f32[1,128], index: 3, kind: input, shape index: {}]
  %s4 = inlined_call_operand.hbm [shape: bf16[64,128], index: 4, kind: input, shape index: {}]
  %s5 = inlined_call_operand.vmem [shape: f32[1,128], index: 5, kind: input, shape index: {}]
  %s6 = inlined_call_operand.vmem [shape: f32[1,128], index: 6, kind: input, shape index: {}]
  %s7 = inlined_call_operand.<no memory space> [shape: f32[1,1], index: 7, kind: input, shape index: {}]
  %s8 = inlined_call_operand.hbm [shape: f32[16,128], index: 8, kind: output, shape index: {0}]
  %s9 = inlined_call_operand.hbm [shape: f32[16,128], index: 9, kind: output, shape index: {1}]
  %10 = xla_tuple %s8, %s9
  %s11 = sld [smem:[#allocation0]]
  $region89: #{tpu_custom_call.1} parent=0
    _
  %s13 = ssub.s32 1, %s11
  %s14 = scalar_select 0, %s13, %s11
  %15 = sst [smem:[#allocation2]] %s7
  $region1: #{tpu_custom_call.1} parent=0
    #allocation3 [shape = 'u8[65536]{0}', space=vmem, size = 0x10000, scoped, tag = 'input window, operand 0']
    #allocation4 [shape = 's32[2]{0}', space=sflag, size = 0x8, scoped, tag = 'scoped memory for tpu_custom_call.1']
    #allocation5 [shape = 's32[2]{0}', space=sflag, size = 0x8, scoped, tag = 'scoped memory for tpu_custom_call.1']
    #allocation6 [shape = 'u8[8192]{0}', space=vmem, size = 0x2000, scoped, tag = 'input window, operand 1']
    #allocation7 [shape = 's32[2]{0}', space=sflag, size = 0x8, scoped, tag = 'scoped memory for tpu_custom_call.1']
    #allocation8 [shape = 'u8[32768]{0}', space=vmem, size = 0x8000, scoped, tag = 'input window, operand 2, single buffered']
    #allocation9 [shape = 'u8[16384]{0}', space=vmem, size = 0x4000, scoped, tag = 'input window, operand 4, single buffered']
    #allocation10 [shape = 's32[1]{0}', space=sflag, size = 0x4, scoped, tag = 'scoped memory for tpu_custom_call.1']
    #allocation11 [shape = 'u8[8192]{0}', space=vmem, size = 0x2000, scoped, tag = 'output window, operand 0']
    #allocation12 [shape = 'u8[8192]{0}', space=vmem, size = 0x2000, scoped, tag = 'output window, operand 1']
    #allocation13 [shape = 's32[2]{0}', space=sflag, size = 0x8, scoped, tag = 'scoped memory for tpu_custom_call.1']
    %16 = vsyncpa [#allocation4], 0
    %s17 = scalar_lea.sflag [#allocation4], 1
    %18 = vsyncpa %s17, 0
    %19 = vsyncpa [#allocation7], 0
    %s20 = scalar_lea.sflag [#allocation7], 1
    %21 = vsyncpa %s20, 0
    %22 = vsyncpa [#allocation10], 0
    %23 = vsyncpa [#allocation5], 0
    %s24 = scalar_lea.sflag [#allocation5], 1
    %25 = vsyncpa %s24, 0
    %26 = vsyncpa [#allocation13], 0
    %s27 = scalar_lea.sflag [#allocation13], 1
    %28 = vsyncpa %s27, 0
    loop: start=0, step=1, limit=4
    $region2: #{tpu_custom_call.1} parent=1 // loop_pre_header
      _
    $region3: #{tpu_custom_call.1} parent=1 // loop_header
      %s30 = sphi 0, %s34
      %p31 = scmp.ge.s32.totalorder %s30, 4
      %s40 = sphi 0, %s42
      %s43 = sphi 0, %s40
      %s44 = sphi 0, %s43
      %s60 = sphi 0, %s44
      %s66 = sphi 0, %s68
      %s69 = sphi 0, %s66
      %s70 = sphi 0, %s69
      %s86 = sphi 0, %s70
      %s90 = sphi 0, %s90
      %s92 = sphi 0, %s90
      %s93 = sphi 0, %s92
      %s107 = sphi 0, %s93
      %s111 = sphi 0, %s111
      %s113 = sphi 0, %s111
      %s114 = sphi 0, %s113
      %s128 = sphi 0, %s114
      %s132 = sphi 0, %s132
      %s134 = sphi 0, %s132
      %s135 = sphi 0, %s134
      %s149 = sphi 0, %s135
      %s153 = sphi 0, %s153
      %s155 = sphi 0, %s153
      %s156 = sphi 0, %s155
      %s170 = sphi 0, %s156
      %s174 = sphi 0, %s174
      %s176 = sphi 0, %s174
      %s177 = sphi 0, %s176
      %s191 = sphi 0, %s177
      %s195 = sphi 0, %s195
      %s197 = sphi 0, %s195
      %s198 = sphi 0, %s197
      %s212 = sphi 0, %s198
      %s218 = sphi 0, %s220
      %s221 = sphi 0, %s218
      %s222 = sphi 0, %s221
      %s238 = sphi 0, %s222
      %s244 = sphi 0, %s246
      %s247 = sphi 0, %s244
      %s248 = sphi 0, %s247
      %s264 = sphi 0, %s248
    $region4: #{tpu_custom_call.1} parent=1 // loop_header_branch
      %33 = sbr.rel (%p31) target = $region8
    $region5: #{tpu_custom_call.1} parent=1 // loop_body
      %s35 = ssub.s32 %s30, 1
      %s36 = ssub.s32 %s30, 2
      %s37 = sadd.s32 %s30, 1
      %s38 = ssub.s32 %s30, %s37
      %p39 = scmp.eq.s32.totalorder %s38, 0
      %s41 = sadd.s32 %s40, 1
      %s42 = scalar_select %p39, %s40, %s41
      %p45 = pneg %p39
      %p46 = scmp.eq.s32.totalorder %s30, 1
      %p47 = por %p45, %p46
      %p48 = scmp.ne.s32.totalorder %s40, %s43
      %p49 = scmp.eq.s32.totalorder %s30, 0
      %p50 = por %p48, %p49
      %p51 = scmp.ne.s32.totalorder %s40, %s43
      %p52 = scmp.eq.s32.totalorder %s35, 1
      %p53 = por %p51, %p52
      %p54 = scmp.ne.s32.totalorder %s43, %s44
      %p55 = scmp.eq.s32.totalorder %s35, 0
      %p56 = por %p54, %p55
      %p57 = scmp.ne.s32.totalorder %s43, %s44
      %p58 = scmp.eq.s32.totalorder %s36, 1
      %p59 = por %p57, %p58
      %p61 = scmp.ne.s32.totalorder %s44, %s60
      %p62 = scmp.eq.s32.totalorder %s36, 0
      %p63 = por %p61, %p62
      %s64 = ssub.s32 %s30, %s37
      %p65 = scmp.eq.s32.totalorder %s64, 0
      %s67 = sadd.s32 %s66, 1
      %s68 = scalar_select %p65, %s66, %s67
      %p71 = pneg %p65
      %p72 = scmp.eq.s32.totalorder %s30, 1
      %p73 = por %p71, %p72
      %p74 = scmp.ne.s32.totalorder %s66, %s69
      %p75 = scmp.eq.s32.totalorder %s30, 0
      %p76 = por %p74, %p75
      %p77 = scmp.ne.s32.totalorder %s66, %s69
      %p78 = scmp.eq.s32.totalorder %s35, 1
      %p79 = por %p77, %p78
      %p80 = scmp.ne.s32.totalorder %s69, %s70
      %p81 = scmp.eq.s32.totalorder %s35, 0
      %p82 = por %p80, %p81
      %p83 = scmp.ne.s32.totalorder %s69, %s70
      %p84 = scmp.eq.s32.totalorder %s36, 1
      %p85 = por %p83, %p84
      %p87 = scmp.ne.s32.totalorder %s70, %s86
      %p88 = scmp.eq.s32.totalorder %s36, 0
      %p89 = por %p87, %p88
      %s91 = sadd.s32 %s90, 1
      %p94 = scmp.eq.s32.totalorder %s30, 1
      %p95 = scmp.ne.s32.totalorder %s90, %s92
      %p96 = scmp.eq.s32.totalorder %s30, 0
      %p97 = por %p95, %p96
      %p98 = scmp.ne.s32.totalorder %s90, %s92
      %p99 = scmp.eq.s32.totalorder %s35, 1
      %p100 = por %p98, %p99
      %p101 = scmp.ne.s32.totalorder %s92, %s93
      %p102 = scmp.eq.s32.totalorder %s35, 0
      %p103 = por %p101, %p102
      %p104 = scmp.ne.s32.totalorder %s92, %s93
      %p105 = scmp.eq.s32.totalorder %s36, 1
      %p106 = por %p104, %p105
      %p108 = scmp.ne.s32.totalorder %s93, %s107
      %p109 = scmp.eq.s32.totalorder %s36, 0
      %p110 = por %p108, %p109
      %s112 = sadd.s32 %s111, 1
      %p115 = scmp.eq.s32.totalorder %s30, 1
      %p116 = scmp.ne.s32.totalorder %s111, %s113
      %p117 = scmp.eq.s32.totalorder %s30, 0
      %p118 = por %p116, %p117
      %p119 = scmp.ne.s32.totalorder %s111, %s113
      %p120 = scmp.eq.s32.totalorder %s35, 1
      %p121 = por %p119, %p120
      %p122 = scmp.ne.s32.totalorder %s113, %s114
      %p123 = scmp.eq.s32.totalorder %s35, 0
      %p124 = por %p122, %p123
      %p125 = scmp.ne.s32.totalorder %s113, %s114
      %p126 = scmp.eq.s32.totalorder %s36, 1
      %p127 = por %p125, %p126
      %p129 = scmp.ne.s32.totalorder %s114, %s128
      %p130 = scmp.eq.s32.totalorder %s36, 0
      %p131 = por %p129, %p130
      %s133 = sadd.s32 %s132, 1
      %p136 = scmp.eq.s32.totalorder %s30, 1
      %p137 = scmp.ne.s32.totalorder %s132, %s134
      %p138 = scmp.eq.s32.totalorder %s30, 0
      %p139 = por %p137, %p138
      %p140 = scmp.ne.s32.totalorder %s132, %s134
      %p141 = scmp.eq.s32.totalorder %s35, 1
      %p142 = por %p140, %p141
      %p143 = scmp.ne.s32.totalorder %s134, %s135
      %p144 = scmp.eq.s32.totalorder %s35, 0
      %p145 = por %p143, %p144
      %p146 = scmp.ne.s32.totalorder %s134, %s135
      %p147 = scmp.eq.s32.totalorder %s36, 1
      %p148 = por %p146, %p147
      %p150 = scmp.ne.s32.totalorder %s135, %s149
      %p151 = scmp.eq.s32.totalorder %s36, 0
      %p152 = por %p150, %p151
      %s154 = sadd.s32 %s153, 1
      %p157 = scmp.eq.s32.totalorder %s30, 1
      %p158 = scmp.ne.s32.totalorder %s153, %s155
      %p159 = scmp.eq.s32.totalorder %s30, 0
      %p160 = por %p158, %p159
      %p161 = scmp.ne.s32.totalorder %s153, %s155
      %p162 = scmp.eq.s32.totalorder %s35, 1
      %p163 = por %p161, %p162
      %p164 = scmp.ne.s32.totalorder %s155, %s156
      %p165 = scmp.eq.s32.totalorder %s35, 0
      %p166 = por %p164, %p165
      %p167 = scmp.ne.s32.totalorder %s155, %s156
      %p168 = scmp.eq.s32.totalorder %s36, 1
      %p169 = por %p167, %p168
      %p171 = scmp.ne.s32.totalorder %s156, %s170
      %p172 = scmp.eq.s32.totalorder %s36, 0
      %p173 = por %p171, %p172
      %s175 = sadd.s32 %s174, 1
      %p178 = scmp.eq.s32.totalorder %s30, 1
      %p179 = scmp.ne.s32.totalorder %s174, %s176
      %p180 = scmp.eq.s32.totalorder %s30, 0
      %p181 = por %p179, %p180
      %p182 = scmp.ne.s32.totalorder %s174, %s176
      %p183 = scmp.eq.s32.totalorder %s35, 1
      %p184 = por %p182, %p183
      %p185 = scmp.ne.s32.totalorder %s176, %s177
      %p186 = scmp.eq.s32.totalorder %s35, 0
      %p187 = por %p185, %p186
      %p188 = scmp.ne.s32.totalorder %s176, %s177
      %p189 = scmp.eq.s32.totalorder %s36, 1
      %p190 = por %p188, %p189
      %p192 = scmp.ne.s32.totalorder %s177, %s191
      %p193 = scmp.eq.s32.totalorder %s36, 0
      %p194 = por %p192, %p193
      %s196 = sadd.s32 %s195, 1
      %p199 = scmp.eq.s32.totalorder %s30, 1
      %p200 = scmp.ne.s32.totalorder %s195, %s197
      %p201 = scmp.eq.s32.totalorder %s30, 0
      %p202 = por %p200, %p201
      %p203 = scmp.ne.s32.totalorder %s195, %s197
      %p204 = scmp.eq.s32.totalorder %s35, 1
      %p205 = por %p203, %p204
      %p206 = scmp.ne.s32.totalorder %s197, %s198
      %p207 = scmp.eq.s32.totalorder %s35, 0
      %p208 = por %p206, %p207
      %p209 = scmp.ne.s32.totalorder %s197, %s198
      %p210 = scmp.eq.s32.totalorder %s36, 1
      %p211 = por %p209, %p210
      %p213 = scmp.ne.s32.totalorder %s198, %s212
      %p214 = scmp.eq.s32.totalorder %s36, 0
      %p215 = por %p213, %p214
      %s216 = ssub.s32 %s30, %s37
      %p217 = scmp.eq.s32.totalorder %s216, 0
      %s219 = sadd.s32 %s218, 1
      %s220 = scalar_select %p217, %s218, %s219
      %p223 = pneg %p217
      %p224 = scmp.eq.s32.totalorder %s30, 1
      %p225 = por %p223, %p224
      %p226 = scmp.ne.s32.totalorder %s218, %s221
      %p227 = scmp.eq.s32.totalorder %s30, 0
      %p228 = por %p226, %p227
      %p229 = scmp.ne.s32.totalorder %s218, %s221
      %p230 = scmp.eq.s32.totalorder %s35, 1
      %p231 = por %p229, %p230
      %p232 = scmp.ne.s32.totalorder %s221, %s222
      %p233 = scmp.eq.s32.totalorder %s35, 0
      %p234 = por %p232, %p233
      %p235 = scmp.ne.s32.totalorder %s221, %s222
      %p236 = scmp.eq.s32.totalorder %s36, 1
      %p237 = por %p235, %p236
      %p239 = scmp.ne.s32.totalorder %s222, %s238
      %p240 = scmp.eq.s32.totalorder %s36, 0
      %p241 = por %p239, %p240
      %s242 = ssub.s32 %s30, %s37
      %p243 = scmp.eq.s32.totalorder %s242, 0
      %s245 = sadd.s32 %s244, 1
      %s246 = scalar_select %p243, %s244, %s245
      %p249 = pneg %p243
      %p250 = scmp.eq.s32.totalorder %s30, 1
      %p251 = por %p249, %p250
      %p252 = scmp.ne.s32.totalorder %s244, %s247
      %p253 = scmp.eq.s32.totalorder %s30, 0
      %p254 = por %p252, %p253
      %p255 = scmp.ne.s32.totalorder %s244, %s247
      %p256 = scmp.eq.s32.totalorder %s35, 1
      %p257 = por %p255, %p256
      %p258 = scmp.ne.s32.totalorder %s247, %s248
      %p259 = scmp.eq.s32.totalorder %s35, 0
      %p260 = por %p258, %p259
      %p261 = scmp.ne.s32.totalorder %s247, %s248
      %p262 = scmp.eq.s32.totalorder %s36, 1
      %p263 = por %p261, %p262
      %p265 = scmp.ne.s32.totalorder %s248, %s264
      %p266 = scmp.eq.s32.totalorder %s36, 0
      %p267 = por %p265, %p266
      %p268 = scmp.le.s32.totalorder 1, %s30
      %p269 = scmp.lt.s32.totalorder %s30, 3
      %p270 = pnand %p268, %p269
      %p271 = pneg %p270
      // Predicated region
      $region9: #{tpu_custom_call.1} parent=5 // pred_check
        _
      $region10: #{tpu_custom_call.1} parent=5 // pred_check_branch
        %273 = sbr.rel (%p270) target = $region12
      $region11: #{tpu_custom_call.1} parent=5 // pred_region
        %s274 = ssub.s32 %s30, 1
        // Predicated region
        $region13: #{tpu_custom_call.1} parent=11 // pred_check
          %p275 = pneg %p103
        $region14: #{tpu_custom_call.1} parent=11 // pred_check_branch
          %277 = sbr.rel (%p275) target = $region16
        $region15: #{tpu_custom_call.1} parent=11 // pred_region
          %s279 = ssub.s32 1024, 1024
          %280 = vsyncadd [#allocation7], %s279
          %s281 = sshll.u32 [#allocation8], 4
          %s282 = int_to_ptr.vmem [resolvable:$true] %s281
          %287 = dma.hbm_to_vmem [thread:$0]  %s2, 1024, %s282, [#allocation7], 64, 64, 4
        $region16: #{tpu_custom_call.1} parent=11 // pred_fallthru
          _
        // Predicated region
        $region17: #{tpu_custom_call.1} parent=11 // pred_check
          %p288 = pneg %p124
        $region18: #{tpu_custom_call.1} parent=11 // pred_check_branch
          %290 = sbr.rel (%p288) target = $region20
        $region19: #{tpu_custom_call.1} parent=11 // pred_region
          _
        $region20: #{tpu_custom_call.1} parent=11 // pred_fallthru
          _
        // Predicated region
        $region21: #{tpu_custom_call.1} parent=11 // pred_check
          %p291 = pneg %p145
        $region22: #{tpu_custom_call.1} parent=11 // pred_check_branch
          %293 = sbr.rel (%p291) target = $region24
        $region23: #{tpu_custom_call.1} parent=11 // pred_region
          %s295 = ssub.s32 512, 512
          %296 = vsyncadd [#allocation10], %s295
          %s297 = sshll.u32 [#allocation9], 4
          %s298 = int_to_ptr.vmem [resolvable:$true] %s297
          %303 = dma.hbm_to_vmem [thread:$0]  %s4, 512, %s298, [#allocation10], 64, 64, 4
        $region24: #{tpu_custom_call.1} parent=11 // pred_fallthru
          _
        // Predicated region
        $region25: #{tpu_custom_call.1} parent=11 // pred_check
          %p304 = pneg %p166
        $region26: #{tpu_custom_call.1} parent=11 // pred_check_branch
          %306 = sbr.rel (%p304) target = $region28
        $region27: #{tpu_custom_call.1} parent=11 // pred_region
          _
        $region28: #{tpu_custom_call.1} parent=11 // pred_fallthru
          _
        // Predicated region
        $region29: #{tpu_custom_call.1} parent=11 // pred_check
          %p307 = pneg %p187
        $region30: #{tpu_custom_call.1} parent=11 // pred_check_branch
          %309 = sbr.rel (%p307) target = $region32
        $region31: #{tpu_custom_call.1} parent=11 // pred_region
          _
        $region32: #{tpu_custom_call.1} parent=11 // pred_fallthru
          _
        // Predicated region
        $region33: #{tpu_custom_call.1} parent=11 // pred_check
          %p310 = pneg %p208
        $region34: #{tpu_custom_call.1} parent=11 // pred_check_branch
          %312 = sbr.rel (%p310) target = $region36
        $region35: #{tpu_custom_call.1} parent=11 // pred_region
          _
        $region36: #{tpu_custom_call.1} parent=11 // pred_fallthru
          _
      $region12: #{tpu_custom_call.1} parent=5 // pred_fallthru
        _
      %p313 = scmp.lt.s32.totalorder %s30, 2
      // Predicated region
      $region37: #{tpu_custom_call.1} parent=5 // pred_check
        %p314 = pneg %p313
      $region38: #{tpu_custom_call.1} parent=5 // pred_check_branch
        %316 = sbr.rel (%p314) target = $region40
      $region39: #{tpu_custom_call.1} parent=5 // pred_region
        // Predicated region
        $region41: #{tpu_custom_call.1} parent=39 // pred_check
          %p317 = pneg %p50
        $region42: #{tpu_custom_call.1} parent=39 // pred_check_branch
          %319 = sbr.rel (%p317) target = $region44
        $region43: #{tpu_custom_call.1} parent=39 // pred_region
          %s320 = sand.u32 %s40, 1
          %s321 = scalar_lea.sflag [#allocation4], %s320
          %s322 = sand.u32 %s40, 1
          %s323 = smul.addr %s322, 64
          %s324 = scalar_lea.vmem [#allocation3], %s323
          %s325 = smul.u32 8, %s30
          %s327 = ssub.s32 1024, 1024
          %328 = vsyncadd %s321, %s327
          %s329 = smul.addr %s325, 2
          %s330 = smul.addr %s329, 64
          %s331 = scalar_lea.hbm %s0, %s330
          %s332 = sshll.u32 %s324, 4
          %s333 = int_to_ptr.vmem [resolvable:$true] %s332
          %338 = dma.hbm_to_vmem [thread:$0]  %s331, 1024, %s333, %s321, 64, 64, 4
        $region44: #{tpu_custom_call.1} parent=39 // pred_fallthru
          _
        // Predicated region
        $region45: #{tpu_custom_call.1} parent=39 // pred_check
          %p339 = pneg %p76
        $region46: #{tpu_custom_call.1} parent=39 // pred_check_branch
          %341 = sbr.rel (%p339) target = $region48
        $region47: #{tpu_custom_call.1} parent=39 // pred_region
          %s342 = sand.u32 %s30, 1
          %s343 = scalar_lea.sflag [#allocation7], %s342
          %s344 = sand.u32 %s66, 1
          %s345 = smul.addr %s344, 8
          %s346 = scalar_lea.vmem [#allocation6], %s345
          %s348 = ssub.s32 128, 128
          %349 = vsyncadd %s343, %s348
          %s350 = smul.addr %s30, 128
          %s351 = scalar_lea.hbm %s1, %s350
          %s353 = sshll.u32 %s346, 4
          %s354 = int_to_ptr.vmem [resolvable:$true] %s353
          %356 = dma.hbm_to_vmem [thread:$0]  %s351, 128, %s354, %s343
        $region48: #{tpu_custom_call.1} parent=39 // pred_fallthru
          _
      $region40: #{tpu_custom_call.1} parent=5 // pred_fallthru
        _
      %p357 = scmp.le.s32.totalorder 1, %s30
      %p358 = scmp.lt.s32.totalorder %s30, 3
      %p359 = pnand %p357, %p358
      %p360 = pneg %p359
      // Predicated region
      $region49: #{tpu_custom_call.1} parent=5 // pred_check
        _
      $region50: #{tpu_custom_call.1} parent=5 // pred_check_branch
        %362 = sbr.rel (%p359) target = $region52
      $region51: #{tpu_custom_call.1} parent=5 // pred_region
        %s363 = ssub.s32 %s30, 1
        %s364 = sand.u32 %s43, 1
        %s365 = scalar_lea.sflag [#allocation4], %s364
        %s366 = sand.u32 %s43, 1
        %s367 = smul.addr %s366, 64
        %s368 = scalar_lea.vmem [#allocation3], %s367
        // Predicated region
        $region53: #{tpu_custom_call.1} parent=51 // pred_check
          %p369 = pneg %p56
        $region54: #{tpu_custom_call.1} parent=51 // pred_check_branch
          %371 = sbr.rel (%p369) target = $region56
        $region55: #{tpu_custom_call.1} parent=51 // pred_region
          %372 = dma.done %s365, 1024
        $region56: #{tpu_custom_call.1} parent=51 // pred_fallthru
          _
        %s373 = sand.u32 %s35, 1
        %s374 = scalar_lea.sflag [#allocation7], %s373
        %s375 = sand.u32 %s69, 1
        %s376 = smul.addr %s375, 8
        %s377 = scalar_lea.vmem [#allocation6], %s376
        // Predicated region
        $region57: #{tpu_custom_call.1} parent=51 // pred_check
          %p378 = pneg %p82
        $region58: #{tpu_custom_call.1} parent=51 // pred_check_branch
          %380 = sbr.rel (%p378) target = $region60
        $region59: #{tpu_custom_call.1} parent=51 // pred_region
          %381 = dma.done %s374, 128
        $region60: #{tpu_custom_call.1} parent=51 // pred_fallthru
          _
        // Predicated region
        $region61: #{tpu_custom_call.1} parent=51 // pred_check
          %p382 = pneg %p103
        $region62: #{tpu_custom_call.1} parent=51 // pred_check_branch
          %384 = sbr.rel (%p382) target = $region64
        $region63: #{tpu_custom_call.1} parent=51 // pred_region
          %385 = dma.done [#allocation7], 1024
        $region64: #{tpu_custom_call.1} parent=51 // pred_fallthru
          _
        // Predicated region
        $region65: #{tpu_custom_call.1} parent=51 // pred_check
          %p386 = pneg %p145
        $region66: #{tpu_custom_call.1} parent=51 // pred_check_branch
          %388 = sbr.rel (%p386) target = $region68
        $region67: #{tpu_custom_call.1} parent=51 // pred_region
          %389 = dma.done [#allocation10], 512
        $region68: #{tpu_custom_call.1} parent=51 // pred_fallthru
          _
        %s390 = sand.u32 %s43, 1
        %s391 = scalar_lea.sflag [#allocation4], %s390
        %s392 = sand.u32 %s43, 1
        %s393 = smul.addr %s392, 64
        %s394 = scalar_lea.vmem [#allocation3], %s393
        %p395 = pneg %p56
        %p396 = pneg %p53
        %s397 = sand.u32 %s35, 1
        %s398 = scalar_lea.sflag [#allocation7], %s397
        %s399 = sand.u32 %s69, 1
        %s400 = smul.addr %s399, 8
        %s401 = scalar_lea.vmem [#allocation6], %s400
        %p402 = pneg %p82
        %p403 = pneg %p79
        %p404 = pneg %p103
        %p405 = pneg %p100
        %p406 = pneg %p124
        %p407 = pneg %p121
        %p408 = pneg %p145
        %p409 = pneg %p142
        %p410 = pneg %p166
        %p411 = pneg %p163
        %p412 = pneg %p187
        %p413 = pneg %p184
        %p414 = pneg %p208
        %p415 = pneg %p205
        %p416 = pneg %p234
        %p417 = pneg %p231
        %s418 = sand.u32 %s221, 1
        %s419 = scalar_lea.sflag [#allocation5], %s418
        %s420 = sand.u32 %s221, 1
        %s421 = smul.addr %s420, 8
        %s422 = scalar_lea.vmem [#allocation11], %s421
        %p423 = pneg %p260
        %p424 = pneg %p257
        %s425 = sand.u32 %s247, 1
        %s426 = scalar_lea.sflag [#allocation13], %s425
        %s427 = sand.u32 %s247, 1
        %s428 = smul.addr %s427, 8
        %s429 = scalar_lea.vmem [#allocation12], %s428
        %s430 = smul.u32 8, %s35
        %v432 = vld [vmem:[%s368] sm:$0xf]
        %v433 = vld [vmem:[%s368 + $0x4] sm:$0xf]
        %v434 = vld [vmem:[%s368 + $0x8] sm:$0xf]
        %v435 = vld [vmem:[%s368 + $0xc] sm:$0xf]
        %v436 = vld [vmem:[%s368 + $0x10] sm:$0xf]
        %v437 = vld [vmem:[%s368 + $0x14] sm:$0xf]
        %v438 = vld [vmem:[%s368 + $0x18] sm:$0xf]
        %v439 = vld [vmem:[%s368 + $0x1c] sm:$0xf]
        %v440 = vld [vmem:[%s368 + $0x20] sm:$0xf]
        %v441 = vld [vmem:[%s368 + $0x24] sm:$0xf]
        %v442 = vld [vmem:[%s368 + $0x28] sm:$0xf]
        %v443 = vld [vmem:[%s368 + $0x2c] sm:$0xf]
        %v444 = vld [vmem:[%s368 + $0x30] sm:$0xf]
        %v445 = vld [vmem:[%s368 + $0x34] sm:$0xf]
        %v446 = vld [vmem:[%s368 + $0x38] sm:$0xf]
        %v447 = vld [vmem:[%s368 + $0x3c] sm:$0xf]
        %v448 = vld [vmem:[#allocation8] sm:$0xf]
        %v449 = vld [vmem:[#allocation8 + $0x4] sm:$0xf]
        %v450 = vld [vmem:[#allocation8 + $0x8] sm:$0xf]
        %v451 = vld [vmem:[#allocation8 + $0xc] sm:$0xf]
        %v452 = vld [vmem:[#allocation8 + $0x10] sm:$0xf]
        %v453 = vld [vmem:[#allocation8 + $0x14] sm:$0xf]
        %v454 = vld [vmem:[#allocation8 + $0x18] sm:$0xf]
        %v455 = vld [vmem:[#allocation8 + $0x1c] sm:$0xf]
        %v456 = vld [vmem:[#allocation8 + $0x20] sm:$0xf]
        %v457 = vld [vmem:[#allocation8 + $0x24] sm:$0xf]
        %v458 = vld [vmem:[#allocation8 + $0x28] sm:$0xf]
        %v459 = vld [vmem:[#allocation8 + $0x2c] sm:$0xf]
        %v460 = vld [vmem:[#allocation8 + $0x30] sm:$0xf]
        %v461 = vld [vmem:[#allocation8 + $0x34] sm:$0xf]
        %v462 = vld [vmem:[#allocation8 + $0x38] sm:$0xf]
        %v463 = vld [vmem:[#allocation8 + $0x3c] sm:$0xf]
        %v464 = vld [vmem:[%s3] sm:$0x1]
        %v466 = vlaneseq
        %v467 = vshrl.u32 %v466, 7
        %v468 = vsub.s32 0, %v467
        %v469 = vrot.slane %v464, %v468
        %v487 = vunpack.c.l.b16 %v432
        %v488 = vunpack.c.l.b16 %v433
        %v489 = vunpack.c.l.b16 %v434
        %v490 = vunpack.c.l.b16 %v435
        %v491 = vunpack.c.l.b16 %v436
        %v492 = vunpack.c.l.b16 %v437
        %v493 = vunpack.c.l.b16 %v438
        %v494 = vunpack.c.l.b16 %v439
        %v495 = vunpack.c.l.b16 %v440
        %v496 = vunpack.c.l.b16 %v441
        %v497 = vunpack.c.l.b16 %v442
        %v498 = vunpack.c.l.b16 %v443
        %v499 = vunpack.c.l.b16 %v444
        %v500 = vunpack.c.l.b16 %v445
        %v501 = vunpack.c.l.b16 %v446
        %v502 = vunpack.c.l.b16 %v447
        %v503 = vpack.c.b16 %v488, %v487
        %v504 = vpack.c.b16 %v490, %v489
        %v505 = vpack.c.b16 %v492, %v491
        %v506 = vpack.c.b16 %v494, %v493
        %v507 = vpack.c.b16 %v496, %v495
        %v508 = vpack.c.b16 %v498, %v497
        %v509 = vpack.c.b16 %v500, %v499
        %v510 = vpack.c.b16 %v502, %v501
        %v535 = vunpack.c.l.b16 %v448
        %v536 = vunpack.c.l.b16 %v449
        %v537 = vunpack.c.l.b16 %v450
        %v538 = vunpack.c.l.b16 %v451
        %v539 = vunpack.c.l.b16 %v452
        %v540 = vunpack.c.l.b16 %v453
        %v541 = vunpack.c.l.b16 %v454
        %v542 = vunpack.c.l.b16 %v455
        %v543 = vunpack.c.l.b16 %v456
        %v544 = vunpack.c.l.b16 %v457
        %v545 = vunpack.c.l.b16 %v458
        %v546 = vunpack.c.l.b16 %v459
        %v547 = vunpack.c.l.b16 %v460
        %v548 = vunpack.c.l.b16 %v461
        %v549 = vunpack.c.l.b16 %v462
        %v550 = vunpack.c.l.b16 %v463
        %v551 = vpack.c.b16 %v536, %v535
        %v552 = vpack.c.b16 %v538, %v537
        %v553 = vpack.c.b16 %v540, %v539
        %v554 = vpack.c.b16 %v542, %v541
        %v555 = vpack.c.b16 %v544, %v543
        %v556 = vpack.c.b16 %v546, %v545
        %v557 = vpack.c.b16 %v548, %v547
        %v558 = vpack.c.b16 %v550, %v549
        %567 = vmatprep.subr.bf16.mxu0 0
        %568 = vmatpush1.bf16.msra.mxu0 %v551
        %569 = vmatprep.subr.bf16.mxu0 0
        %570 = vmatpush1.bf16.msra.mxu0 %v552
        %571 = vmatprep.subr.bf16.mxu0 0
        %572 = vmatpush1.bf16.msra.mxu0 %v553
        %573 = vmatprep.subr.bf16.mxu0 0
        %574 = vmatpush1.bf16.msra.mxu0 %v554
        %575 = vmatprep.subr.bf16.mxu0 0
        %576 = vmatpush1.bf16.msra.mxu0 %v555
        %577 = vmatprep.subr.bf16.mxu0 0
        %578 = vmatpush1.bf16.msra.mxu0 %v556
        %579 = vmatprep.subr.bf16.mxu0 0
        %580 = vmatpush1.bf16.msra.mxu0 %v557
        %581 = vmatprep.subr.bf16.mxu0 0
        %582 = vmatpush1.bf16.msra.mxu0 %v558
        %583 = vmatprep.subr.bf16.mxu0 0
        %584 = vmatpush1.bf16.msra.mxu0 0
        %585 = vmatprep.subr.bf16.mxu0 0
        %586 = vmatpush1.bf16.msra.mxu0 0
        %587 = vmatprep.subr.bf16.mxu0 0
        %588 = vmatpush1.bf16.msra.mxu0 0
        %589 = vmatprep.subr.bf16.mxu0 0
        %590 = vmatpush1.bf16.msra.mxu0 0
        %591 = vmatprep.subr.bf16.mxu0 0
        %592 = vmatpush1.bf16.msra.mxu0 0
        %593 = vmatprep.subr.bf16.mxu0 0
        %594 = vmatpush1.bf16.msra.mxu0 0
        %595 = vmatprep.subr.bf16.mxu0 0
        %596 = vmatpush1.bf16.msra.mxu0 0
        %597 = vmatprep.subr.bf16.mxu0 0
        %598 = vmatpush1.bf16.msra.mxu0 0
        %599 = vmatprep.mubr.bf16.mxu0 0
        %600 = vmatmul.mubr.bf16.gmra.mrb[0].mxu0 %v503
        %v601 = vpop.f32.mrb[0].mxu0
        %v602 = vadd.f32 %v469, %v601
        %v603 = vpop.f32.mrb[0].mxu0
        %v604 = vpop.f32.mrb[0].mxu0
        %v605 = vadd.f32 %v469, %v604
        %v606 = vpop.f32.mrb[0].mxu0
        %607 = vmatprep.mubr.bf16.mxu0 0
        %608 = vmatmul.mubr.bf16.gmra.mrb[0].mxu0 %v504
        %v609 = vpop.f32.mrb[0].mxu0
        %v610 = vadd.f32 %v469, %v609
        %v611 = vpop.f32.mrb[0].mxu0
        %v612 = vpop.f32.mrb[0].mxu0
        %v613 = vadd.f32 %v469, %v612
        %v614 = vpop.f32.mrb[0].mxu0
        %615 = vmatprep.mubr.bf16.mxu0 0
        %616 = vmatmul.mubr.bf16.gmra.mrb[0].mxu0 %v505
        %v617 = vpop.f32.mrb[0].mxu0
        %v618 = vadd.f32 %v469, %v617
        %v619 = vpop.f32.mrb[0].mxu0
        %v620 = vpop.f32.mrb[0].mxu0
        %v621 = vadd.f32 %v469, %v620
        %v622 = vpop.f32.mrb[0].mxu0
        %623 = vmatprep.mubr.bf16.mxu0 0
        %624 = vmatmul.mubr.bf16.gmra.mrb[0].mxu0 %v506
        %v625 = vpop.f32.mrb[0].mxu0
        %v626 = vadd.f32 %v469, %v625
        %v627 = vpop.f32.mrb[0].mxu0
        %v628 = vpop.f32.mrb[0].mxu0
        %v629 = vadd.f32 %v469, %v628
        %v630 = vpop.f32.mrb[0].mxu0
        %631 = vmatprep.mubr.bf16.mxu0 0
        %632 = vmatmul.mubr.bf16.gmra.mrb[0].mxu0 %v507
        %v633 = vpop.f32.mrb[0].mxu0
        %v634 = vadd.f32 %v469, %v633
        %v635 = vpop.f32.mrb[0].mxu0
        %v636 = vpop.f32.mrb[0].mxu0
        %v637 = vadd.f32 %v469, %v636
        %v638 = vpop.f32.mrb[0].mxu0
        %639 = vmatprep.mubr.bf16.mxu0 0
        %640 = vmatmul.mubr.bf16.gmra.mrb[0].mxu0 %v508
        %v641 = vpop.f32.mrb[0].mxu0
        %v642 = vadd.f32 %v469, %v641
        %v643 = vpop.f32.mrb[0].mxu0
        %v644 = vpop.f32.mrb[0].mxu0
        %v645 = vadd.f32 %v469, %v644
        %v646 = vpop.f32.mrb[0].mxu0
        %647 = vmatprep.mubr.bf16.mxu0 0
        %648 = vmatmul.mubr.bf16.gmra.mrb[0].mxu0 %v509
        %v649 = vpop.f32.mrb[0].mxu0
        %v650 = vadd.f32 %v469, %v649
        %v651 = vpop.f32.mrb[0].mxu0
        %v652 = vpop.f32.mrb[0].mxu0
        %v653 = vadd.f32 %v469, %v652
        %v654 = vpop.f32.mrb[0].mxu0
        %655 = vmatprep.mubr.bf16.mxu0 0
        %656 = vmatmul.mubr.bf16.gmra.mrb[0].mxu0 %v510
        %v657 = vpop.f32.mrb[0].mxu0
        %v658 = vadd.f32 %v469, %v657
        %v659 = vpop.f32.mrb[0].mxu0
        %v660 = vpop.f32.mrb[0].mxu0
        %v661 = vadd.f32 %v469, %v660
        %v662 = vpop.f32.mrb[0].mxu0
        %663 = vdwg.mxu0
        %v664 = vld [vmem:[%s377] sm:$0xff]
        %v665 = vpack.c.bf16 %v664, %v664
        %v666 = vld [vmem:[#allocation9] sm:$0xf]
        %v667 = vld [vmem:[#allocation9 + $0x4] sm:$0xf]
        %v668 = vld [vmem:[#allocation9 + $0x8] sm:$0xf]
        %v669 = vld [vmem:[#allocation9 + $0xc] sm:$0xf]
        %v670 = vld [vmem:[#allocation9 + $0x10] sm:$0xf]
        %v671 = vld [vmem:[#allocation9 + $0x14] sm:$0xf]
        %v672 = vld [vmem:[#allocation9 + $0x18] sm:$0xf]
        %v673 = vld [vmem:[#allocation9 + $0x1c] sm:$0xf]
        %v674 = vld [vmem:[%s5] sm:$0x1]
        %v676 = vlaneseq
        %v677 = vshrl.u32 %v676, 7
        %v678 = vsub.s32 0, %v677
        %v679 = vrot.slane %v674, %v678
        %v689 = vunpack.c.l.b16 %v666
        %v690 = vunpack.c.l.b16 %v667
        %v691 = vunpack.c.l.b16 %v668
        %v692 = vunpack.c.l.b16 %v669
        %v693 = vunpack.c.l.b16 %v670
        %v694 = vunpack.c.l.b16 %v671
        %v695 = vunpack.c.l.b16 %v672
        %v696 = vunpack.c.l.b16 %v673
        %v697 = vpack.c.b16 %v690, %v689
        %v698 = vpack.c.b16 %v692, %v691
        %v699 = vpack.c.b16 %v694, %v693
        %v700 = vpack.c.b16 %v696, %v695
        %vm705 = vcmask 523264
        %v707 = vsel %vm705, %v665, 0
        %709 = vmatprep.subr.bf16.mxu0 0
        %710 = vmatpush1.bf16.msra.mxu0 %v697
        %711 = vmatprep.subr.bf16.mxu0 0
        %712 = vmatpush1.bf16.msra.mxu0 %v698
        %713 = vmatprep.subr.bf16.mxu0 0
        %714 = vmatpush1.bf16.msra.mxu0 %v699
        %715 = vmatprep.subr.bf16.mxu0 0
        %716 = vmatpush1.bf16.msra.mxu0 %v700
        %717 = vmatprep.subr.bf16.mxu0 0
        %718 = vmatpush1.bf16.msra.mxu0 0
        %719 = vmatprep.subr.bf16.mxu0 0
        %720 = vmatpush1.bf16.msra.mxu0 0
        %721 = vmatprep.subr.bf16.mxu0 0
        %722 = vmatpush1.bf16.msra.mxu0 0
        %723 = vmatprep.subr.bf16.mxu0 0
        %724 = vmatpush1.bf16.msra.mxu0 0
        %725 = vmatprep.subr.bf16.mxu0 0
        %726 = vmatpush1.bf16.msra.mxu0 0
        %727 = vmatprep.subr.bf16.mxu0 0
        %728 = vmatpush1.bf16.msra.mxu0 0
        %729 = vmatprep.subr.bf16.mxu0 0
        %730 = vmatpush1.bf16.msra.mxu0 0
        %731 = vmatprep.subr.bf16.mxu0 0
        %732 = vmatpush1.bf16.msra.mxu0 0
        %733 = vmatprep.subr.bf16.mxu0 0
        %734 = vmatpush1.bf16.msra.mxu0 0
        %735 = vmatprep.subr.bf16.mxu0 0
        %736 = vmatpush1.bf16.msra.mxu0 0
        %737 = vmatprep.subr.bf16.mxu0 0
        %738 = vmatpush1.bf16.msra.mxu0 0
        %739 = vmatprep.subr.bf16.mxu0 0
        %740 = vmatpush1.bf16.msra.mxu0 0
        %741 = vmatprep.mubr.bf16.mxu0 0
        %742 = vmatmul.mubr.bf16.gmra.mrb[0].mxu0 %v707
        %v743 = vpop.f32.mrb[0].mxu0
        %v744 = vadd.f32 %v679, %v743
        %v745 = vpop.f32.mrb[0].mxu0
        %v746 = vpop.f32.mrb[0].mxu0
        %v747 = vpop.f32.mrb[0].mxu0
        %748 = vdwg.mxu0
        %v750 = vcombine.high %v744, %v744
        %v752 = vunpack.c.l.s4 1966171168
        %v753 = vunpack.c.0.s8 %v752
        %v754 = vlaneseq
        %v755 = vshrl.u32 %v754, 7
        %v756 = vsub.s32 %v753, %v755
        %v757 = vrot.slane %v744, %v756
        %v759 = vunpack.c.l.s4 1966171168
        %v760 = vunpack.c.0.s8 %v759
        %v761 = vlaneseq
        %v762 = vshrl.u32 %v761, 7
        %v763 = vsub.s32 %v760, %v762
        %v764 = vrot.slane %v750, %v763
        %v765 = vcombine.high %v757, %v757
        %v766 = vcombine.high %v764, %v764
        %v768 = vunpack.c.l.s4 1966171168
        %v769 = vunpack.c.0.s8 %v768
        %v770 = vlaneseq
        %v771 = vshrl.u32 %v770, 7
        %v772 = vsub.s32 %v769, %v771
        %v773 = vrot.slane %v757, %v772
        %v775 = vunpack.c.l.s4 1966171168
        %v776 = vunpack.c.0.s8 %v775
        %v777 = vlaneseq
        %v778 = vshrl.u32 %v777, 7
        %v779 = vsub.s32 %v776, %v778
        %v780 = vrot.slane %v764, %v779
        %v782 = vunpack.c.l.s4 1966171168
        %v783 = vunpack.c.0.s8 %v782
        %v784 = vlaneseq
        %v785 = vshrl.u32 %v784, 7
        %v786 = vsub.s32 %v783, %v785
        %v787 = vrot.slane %v765, %v786
        %v789 = vunpack.c.l.s4 1966171168
        %v790 = vunpack.c.0.s8 %v789
        %v791 = vlaneseq
        %v792 = vshrl.u32 %v791, 7
        %v793 = vsub.s32 %v790, %v792
        %v794 = vrot.slane %v766, %v793
        %v795 = vcombine.high %v773, %v773
        %v796 = vcombine.high %v780, %v780
        %v797 = vcombine.high %v787, %v787
        %v798 = vcombine.high %v794, %v794
        %v799 = vlaneseq
        %v800 = vshrl.u32 %v799, 7
        %v801 = vsub.s32 0, %v800
        %v802 = vrot.slane %v773, %v801
        %v803 = vlaneseq
        %v804 = vshrl.u32 %v803, 7
        %v805 = vsub.s32 0, %v804
        %v806 = vrot.slane %v787, %v805
        %v807 = vlaneseq
        %v808 = vshrl.u32 %v807, 7
        %v809 = vsub.s32 0, %v808
        %v810 = vrot.slane %v795, %v809
        %v811 = vlaneseq
        %v812 = vshrl.u32 %v811, 7
        %v813 = vsub.s32 0, %v812
        %v814 = vrot.slane %v797, %v813
        %v815 = vlaneseq
        %v816 = vshrl.u32 %v815, 7
        %v817 = vsub.s32 0, %v816
        %v818 = vrot.slane %v780, %v817
        %v819 = vlaneseq
        %v820 = vshrl.u32 %v819, 7
        %v821 = vsub.s32 0, %v820
        %v822 = vrot.slane %v794, %v821
        %v823 = vlaneseq
        %v824 = vshrl.u32 %v823, 7
        %v825 = vsub.s32 0, %v824
        %v826 = vrot.slane %v796, %v825
        %v827 = vlaneseq
        %v828 = vshrl.u32 %v827, 7
        %v829 = vsub.s32 0, %v828
        %v830 = vrot.slane %v798, %v829
        %v839 = vadd.f32 %v602, %v802
        %v840 = vadd.f32 %v605, %v802
        %v841 = vadd.f32 %v610, %v806
        %v842 = vadd.f32 %v613, %v806
        %v843 = vadd.f32 %v618, %v810
        %v844 = vadd.f32 %v621, %v810
        %v845 = vadd.f32 %v626, %v814
        %v846 = vadd.f32 %v629, %v814
        %v847 = vadd.f32 %v634, %v818
        %v848 = vadd.f32 %v637, %v818
        %v849 = vadd.f32 %v642, %v822
        %v850 = vadd.f32 %v645, %v822
        %v851 = vadd.f32 %v650, %v826
        %v852 = vadd.f32 %v653, %v826
        %v853 = vadd.f32 %v658, %v830
        %v854 = vadd.f32 %v661, %v830
        %v855 = vmax.f32 %v839, 0.0
        %v856 = vmax.f32 %v840, 0.0
        %v857 = vmax.f32 %v841, 0.0
        %v858 = vmax.f32 %v842, 0.0
        %v859 = vmax.f32 %v843, 0.0
        %v860 = vmax.f32 %v844, 0.0
        %v861 = vmax.f32 %v845, 0.0
        %v862 = vmax.f32 %v846, 0.0
        %v863 = vmax.f32 %v847, 0.0
        %v864 = vmax.f32 %v848, 0.0
        %v865 = vmax.f32 %v849, 0.0
        %v866 = vmax.f32 %v850, 0.0
        %v867 = vmax.f32 %v851, 0.0
        %v868 = vmax.f32 %v852, 0.0
        %v869 = vmax.f32 %v853, 0.0
        %v870 = vmax.f32 %v854, 0.0
        %v871 = vld [vmem:[%s6] sm:$0x1]
        %v873 = vlaneseq
        %v874 = vshrl.u32 %v873, 7
        %v875 = vsub.s32 0, %v874
        %v876 = vrot.slane %v871, %v875
        %v878 = vmul.f32 %v855, %v876
        %v879 = vmul.f32 %v856, %v876
        %v880 = vmul.f32 %v857, %v876
        %v881 = vmul.f32 %v858, %v876
        %v882 = vmul.f32 %v859, %v876
        %v883 = vmul.f32 %v860, %v876
        %v884 = vmul.f32 %v861, %v876
        %v885 = vmul.f32 %v862, %v876
        %v886 = vmul.f32 %v863, %v876
        %v887 = vmul.f32 %v864, %v876
        %v888 = vmul.f32 %v865, %v876
        %v889 = vmul.f32 %v866, %v876
        %v890 = vmul.f32 %v867, %v876
        %v891 = vmul.f32 %v868, %v876
        %v892 = vmul.f32 %v869, %v876
        %v893 = vmul.f32 %v870, %v876
        %894 = vadd.xlane.f32.xlu0 %v878
        %v895 = vpop.xlane.xlu0 %894
        %896 = vadd.xlane.f32.xlu0 %v879
        %v897 = vpop.xlane.xlu0 %896
        %898 = vadd.xlane.f32.xlu0 %v880
        %v899 = vpop.xlane.xlu0 %898
        %900 = vadd.xlane.f32.xlu0 %v881
        %v901 = vpop.xlane.xlu0 %900
        %902 = vadd.xlane.f32.xlu0 %v882
        %v903 = vpop.xlane.xlu0 %902
        %904 = vadd.xlane.f32.xlu0 %v883
        %v905 = vpop.xlane.xlu0 %904
        %906 = vadd.xlane.f32.xlu0 %v884
        %v907 = vpop.xlane.xlu0 %906
        %908 = vadd.xlane.f32.xlu0 %v885
        %v909 = vpop.xlane.xlu0 %908
        %910 = vadd.xlane.f32.xlu0 %v886
        %v911 = vpop.xlane.xlu0 %910
        %912 = vadd.xlane.f32.xlu0 %v887
        %v913 = vpop.xlane.xlu0 %912
        %914 = vadd.xlane.f32.xlu0 %v888
        %v915 = vpop.xlane.xlu0 %914
        %916 = vadd.xlane.f32.xlu0 %v889
        %v917 = vpop.xlane.xlu0 %916
        %918 = vadd.xlane.f32.xlu0 %v890
        %v919 = vpop.xlane.xlu0 %918
        %920 = vadd.xlane.f32.xlu0 %v891
        %v921 = vpop.xlane.xlu0 %920
        %922 = vadd.xlane.f32.xlu0 %v892
        %v923 = vpop.xlane.xlu0 %922
        %924 = vadd.xlane.f32.xlu0 %v893
        %v925 = vpop.xlane.xlu0 %924
        %s926 = sld [smem:[#allocation2]]
        %v927 = vstv %s926
        %v928 = vadd.f32 %v895, %v927
        %v929 = vadd.f32 %v897, %v927
        %v930 = vadd.f32 %v899, %v927
        %v931 = vadd.f32 %v901, %v927
        %v932 = vadd.f32 %v903, %v927
        %v933 = vadd.f32 %v905, %v927
        %v934 = vadd.f32 %v907, %v927
        %v935 = vadd.f32 %v909, %v927
        %v936 = vadd.f32 %v911, %v927
        %v937 = vadd.f32 %v913, %v927
        %v938 = vadd.f32 %v915, %v927
        %v939 = vadd.f32 %v917, %v927
        %v940 = vadd.f32 %v919, %v927
        %v941 = vadd.f32 %v921, %v927
        %v942 = vadd.f32 %v923, %v927
        %v943 = vadd.f32 %v925, %v927
        %v960 = vlaneseq
        %v961 = vand.u32 %v960, 127
        %v962 = vlaneseq
        %v963 = vshrl.u32 %v962, 7
        %v964 = vsub.s32 %v961, %v963
        %v965 = vrot.slane %v928, %v964
        %v966 = vadd.s32 %v961, 4294967288
        %v967 = vlaneseq
        %v968 = vshrl.u32 %v967, 7
        %v969 = vsub.s32 %v966, %v968
        %v970 = vrot.slane %v929, %v969
        %vm971 = vcmask 130112
        %v972 = vsel %vm971, %v970, %v965
        %v973 = vlaneseq
        %v974 = vshrl.u32 %v973, 7
        %v975 = vsub.s32 %v961, %v974
        %v976 = vrot.slane %v930, %v975
        %v977 = vlaneseq
        %v978 = vshrl.u32 %v977, 7
        %v979 = vsub.s32 %v966, %v978
        %v980 = vrot.slane %v931, %v979
        %v981 = vsel %vm971, %v980, %v976
        %v982 = vlaneseq
        %v983 = vshrl.u32 %v982, 7
        %v984 = vsub.s32 %v961, %v983
        %v985 = vrot.slane %v932, %v984
        %v986 = vlaneseq
        %v987 = vshrl.u32 %v986, 7
        %v988 = vsub.s32 %v966, %v987
        %v989 = vrot.slane %v933, %v988
        %v990 = vsel %vm971, %v989, %v985
        %v991 = vlaneseq
        %v992 = vshrl.u32 %v991, 7
        %v993 = vsub.s32 %v961, %v992
        %v994 = vrot.slane %v934, %v993
        %v995 = vlaneseq
        %v996 = vshrl.u32 %v995, 7
        %v997 = vsub.s32 %v966, %v996
        %v998 = vrot.slane %v935, %v997
        %v999 = vsel %vm971, %v998, %v994
        %v1000 = vlaneseq
        %v1001 = vshrl.u32 %v1000, 7
        %v1002 = vsub.s32 %v961, %v1001
        %v1003 = vrot.slane %v936, %v1002
        %v1004 = vlaneseq
        %v1005 = vshrl.u32 %v1004, 7
        %v1006 = vsub.s32 %v966, %v1005
        %v1007 = vrot.slane %v937, %v1006
        %v1008 = vsel %vm971, %v1007, %v1003
        %v1009 = vlaneseq
        %v1010 = vshrl.u32 %v1009, 7
        %v1011 = vsub.s32 %v961, %v1010
        %v1012 = vrot.slane %v938, %v1011
        %v1013 = vlaneseq
        %v1014 = vshrl.u32 %v1013, 7
        %v1015 = vsub.s32 %v966, %v1014
        %v1016 = vrot.slane %v939, %v1015
        %v1017 = vsel %vm971, %v1016, %v1012
        %v1018 = vlaneseq
        %v1019 = vshrl.u32 %v1018, 7
        %v1020 = vsub.s32 %v961, %v1019
        %v1021 = vrot.slane %v940, %v1020
        %v1022 = vlaneseq
        %v1023 = vshrl.u32 %v1022, 7
        %v1024 = vsub.s32 %v966, %v1023
        %v1025 = vrot.slane %v941, %v1024
        %v1026 = vsel %vm971, %v1025, %v1021
        %v1027 = vlaneseq
        %v1028 = vshrl.u32 %v1027, 7
        %v1029 = vsub.s32 %v961, %v1028
        %v1030 = vrot.slane %v942, %v1029
        %v1031 = vlaneseq
        %v1032 = vshrl.u32 %v1031, 7
        %v1033 = vsub.s32 %v966, %v1032
        %v1034 = vrot.slane %v943, %v1033
        %v1035 = vsel %vm971, %v1034, %v1030
        %vm1036 = vcmask 1041409
        %v1037 = vsel %vm1036, %v981, %v972
        %vm1038 = vcmask 1042434
        %v1039 = vsel %vm1038, %v990, %v1037
        %vm1040 = vcmask 1043459
        %v1041 = vsel %vm1040, %v999, %v1039
        %vm1042 = vcmask 1044484
        %v1043 = vsel %vm1042, %v1008, %v1041
        %vm1044 = vcmask 1045509
        %v1045 = vsel %vm1044, %v1017, %v1043
        %vm1046 = vcmask 1046534
        %v1047 = vsel %vm1046, %v1026, %v1045
        %vm1048 = vcmask 1047559
        %v1049 = vsel %vm1048, %v1035, %v1047
        %vm1051 = vcmask 130048
        %v1052 = vsel %vm1051, %v1049, -inf
        %1053 = vmax.xlane.f32.xlu0 %v1052
        %v1054 = vpop.xlane.xlu0 %1053
        %v1056 = vlaneseq
        %v1057 = vshrl.u32 %v1056, 7
        %v1058 = vsub.s32 0, %v1057
        %v1059 = vrot.slane %v1054, %v1058
        %v1060 = vlaneseq
        %v1061 = vshrl.u32 %v1060, 7
        %v1062 = vsub.s32 1, %v1061
        %v1063 = vrot.slane %v1054, %v1062
        %v1064 = vlaneseq
        %v1065 = vshrl.u32 %v1064, 7
        %v1066 = vsub.s32 2, %v1065
        %v1067 = vrot.slane %v1054, %v1066
        %v1068 = vlaneseq
        %v1069 = vshrl.u32 %v1068, 7
        %v1070 = vsub.s32 3, %v1069
        %v1071 = vrot.slane %v1054, %v1070
        %v1072 = vlaneseq
        %v1073 = vshrl.u32 %v1072, 7
        %v1074 = vsub.s32 4, %v1073
        %v1075 = vrot.slane %v1054, %v1074
        %v1076 = vlaneseq
        %v1077 = vshrl.u32 %v1076, 7
        %v1078 = vsub.s32 5, %v1077
        %v1079 = vrot.slane %v1054, %v1078
        %v1080 = vlaneseq
        %v1081 = vshrl.u32 %v1080, 7
        %v1082 = vsub.s32 6, %v1081
        %v1083 = vrot.slane %v1054, %v1082
        %v1084 = vlaneseq
        %v1085 = vshrl.u32 %v1084, 7
        %v1086 = vsub.s32 7, %v1085
        %v1087 = vrot.slane %v1054, %v1086
        %v1096 = vsub.f32 %v928, %v1059
        %v1097 = vsub.f32 %v929, %v1059
        %v1098 = vsub.f32 %v930, %v1063
        %v1099 = vsub.f32 %v931, %v1063
        %v1100 = vsub.f32 %v932, %v1067
        %v1101 = vsub.f32 %v933, %v1067
        %v1102 = vsub.f32 %v934, %v1071
        %v1103 = vsub.f32 %v935, %v1071
        %v1104 = vsub.f32 %v936, %v1075
        %v1105 = vsub.f32 %v937, %v1075
        %v1106 = vsub.f32 %v938, %v1079
        %v1107 = vsub.f32 %v939, %v1079
        %v1108 = vsub.f32 %v940, %v1083
        %v1109 = vsub.f32 %v941, %v1083
        %v1110 = vsub.f32 %v942, %v1087
        %v1111 = vsub.f32 %v943, %v1087
        %v1112 = vmul.f32 %v1096, 1.442695
        %v1113 = vpow.pop %v1112
        %v1114 = vmul.f32 %v1097, 1.442695
        %v1115 = vpow.pop %v1114
        %v1116 = vmul.f32 %v1098, 1.442695
        %v1117 = vpow.pop %v1116
        %v1118 = vmul.f32 %v1099, 1.442695
        %v1119 = vpow.pop %v1118
        %v1120 = vmul.f32 %v1100, 1.442695
        %v1121 = vpow.pop %v1120
        %v1122 = vmul.f32 %v1101, 1.442695
        %v1123 = vpow.pop %v1122
        %v1124 = vmul.f32 %v1102, 1.442695
        %v1125 = vpow.pop %v1124
        %v1126 = vmul.f32 %v1103, 1.442695
        %v1127 = vpow.pop %v1126
        %v1128 = vmul.f32 %v1104, 1.442695
        %v1129 = vpow.pop %v1128
        %v1130 = vmul.f32 %v1105, 1.442695
        %v1131 = vpow.pop %v1130
        %v1132 = vmul.f32 %v1106, 1.442695
        %v1133 = vpow.pop %v1132
        %v1134 = vmul.f32 %v1107, 1.442695
        %v1135 = vpow.pop %v1134
        %v1136 = vmul.f32 %v1108, 1.442695
        %v1137 = vpow.pop %v1136
        %v1138 = vmul.f32 %v1109, 1.442695
        %v1139 = vpow.pop %v1138
        %v1140 = vmul.f32 %v1110, 1.442695
        %v1141 = vpow.pop %v1140
        %v1142 = vmul.f32 %v1111, 1.442695
        %v1143 = vpow.pop %v1142
        %1160 = vset.pattern.permute.xlu0 0
        %1161 = vperm.xlu0 %1160, %v1113
        %v1162 = vpop.permute.xlu0 %1161
        %1163 = vset.pattern.permute.xlu0 0
        %1164 = vperm.xlu0 %1163, %v1115
        %v1165 = vpop.permute.xlu0 %1164
        %1166 = vset.pattern.permute.xlu0 0
        %1167 = vperm.xlu0 %1166, %v1117
        %v1168 = vpop.permute.xlu0 %1167
        %1169 = vset.pattern.permute.xlu0 0
        %1170 = vperm.xlu0 %1169, %v1119
        %v1171 = vpop.permute.xlu0 %1170
        %1172 = vset.pattern.permute.xlu0 0
        %1173 = vperm.xlu0 %1172, %v1121
        %v1174 = vpop.permute.xlu0 %1173
        %1175 = vset.pattern.permute.xlu0 0
        %1176 = vperm.xlu0 %1175, %v1123
        %v1177 = vpop.permute.xlu0 %1176
        %1178 = vset.pattern.permute.xlu0 0
        %1179 = vperm.xlu0 %1178, %v1125
        %v1180 = vpop.permute.xlu0 %1179
        %1181 = vset.pattern.permute.xlu0 0
        %1182 = vperm.xlu0 %1181, %v1127
        %v1183 = vpop.permute.xlu0 %1182
        %1184 = vset.pattern.permute.xlu0 0
        %1185 = vperm.xlu0 %1184, %v1129
        %v1186 = vpop.permute.xlu0 %1185
        %1187 = vset.pattern.permute.xlu0 0
        %1188 = vperm.xlu0 %1187, %v1131
        %v1189 = vpop.permute.xlu0 %1188
        %1190 = vset.pattern.permute.xlu0 0
        %1191 = vperm.xlu0 %1190, %v1133
        %v1192 = vpop.permute.xlu0 %1191
        %1193 = vset.pattern.permute.xlu0 0
        %1194 = vperm.xlu0 %1193, %v1135
        %v1195 = vpop.permute.xlu0 %1194
        %1196 = vset.pattern.permute.xlu0 0
        %1197 = vperm.xlu0 %1196, %v1137
        %v1198 = vpop.permute.xlu0 %1197
        %1199 = vset.pattern.permute.xlu0 0
        %1200 = vperm.xlu0 %1199, %v1139
        %v1201 = vpop.permute.xlu0 %1200
        %1202 = vset.pattern.permute.xlu0 0
        %1203 = vperm.xlu0 %1202, %v1141
        %v1204 = vpop.permute.xlu0 %1203
        %1205 = vset.pattern.permute.xlu0 0
        %1206 = vperm.xlu0 %1205, %v1143
        %v1207 = vpop.permute.xlu0 %1206
        %v1208 = vlaneseq
        %v1209 = vshrl.u32 %v1208, 7
        %v1210 = vsub.s32 %v961, %v1209
        %v1211 = vrot.slane %v1162, %v1210
        %v1212 = vlaneseq
        %v1213 = vshrl.u32 %v1212, 7
        %v1214 = vsub.s32 %v966, %v1213
        %v1215 = vrot.slane %v1165, %v1214
        %v1216 = vsel %vm971, %v1215, %v1211
        %v1217 = vlaneseq
        %v1218 = vshrl.u32 %v1217, 7
        %v1219 = vsub.s32 %v961, %v1218
        %v1220 = vrot.slane %v1168, %v1219
        %v1221 = vlaneseq
        %v1222 = vshrl.u32 %v1221, 7
        %v1223 = vsub.s32 %v966, %v1222
        %v1224 = vrot.slane %v1171, %v1223
        %v1225 = vsel %vm971, %v1224, %v1220
        %v1226 = vlaneseq
        %v1227 = vshrl.u32 %v1226, 7
        %v1228 = vsub.s32 %v961, %v1227
        %v1229 = vrot.slane %v1174, %v1228
        %v1230 = vlaneseq
        %v1231 = vshrl.u32 %v1230, 7
        %v1232 = vsub.s32 %v966, %v1231
        %v1233 = vrot.slane %v1177, %v1232
        %v1234 = vsel %vm971, %v1233, %v1229
        %v1235 = vlaneseq
        %v1236 = vshrl.u32 %v1235, 7
        %v1237 = vsub.s32 %v961, %v1236
        %v1238 = vrot.slane %v1180, %v1237
        %v1239 = vlaneseq
        %v1240 = vshrl.u32 %v1239, 7
        %v1241 = vsub.s32 %v966, %v1240
        %v1242 = vrot.slane %v1183, %v1241
        %v1243 = vsel %vm971, %v1242, %v1238
        %v1244 = vlaneseq
        %v1245 = vshrl.u32 %v1244, 7
        %v1246 = vsub.s32 %v961, %v1245
        %v1247 = vrot.slane %v1186, %v1246
        %v1248 = vlaneseq
        %v1249 = vshrl.u32 %v1248, 7
        %v1250 = vsub.s32 %v966, %v1249
        %v1251 = vrot.slane %v1189, %v1250
        %v1252 = vsel %vm971, %v1251, %v1247
        %v1253 = vlaneseq
        %v1254 = vshrl.u32 %v1253, 7
        %v1255 = vsub.s32 %v961, %v1254
        %v1256 = vrot.slane %v1192, %v1255
        %v1257 = vlaneseq
        %v1258 = vshrl.u32 %v1257, 7
        %v1259 = vsub.s32 %v966, %v1258
        %v1260 = vrot.slane %v1195, %v1259
        %v1261 = vsel %vm971, %v1260, %v1256
        %v1262 = vlaneseq
        %v1263 = vshrl.u32 %v1262, 7
        %v1264 = vsub.s32 %v961, %v1263
        %v1265 = vrot.slane %v1198, %v1264
        %v1266 = vlaneseq
        %v1267 = vshrl.u32 %v1266, 7
        %v1268 = vsub.s32 %v966, %v1267
        %v1269 = vrot.slane %v1201, %v1268
        %v1270 = vsel %vm971, %v1269, %v1265
        %v1271 = vlaneseq
        %v1272 = vshrl.u32 %v1271, 7
        %v1273 = vsub.s32 %v961, %v1272
        %v1274 = vrot.slane %v1204, %v1273
        %v1275 = vlaneseq
        %v1276 = vshrl.u32 %v1275, 7
        %v1277 = vsub.s32 %v966, %v1276
        %v1278 = vrot.slane %v1207, %v1277
        %v1279 = vsel %vm971, %v1278, %v1274
        %v1280 = vsel %vm1036, %v1225, %v1216
        %v1281 = vsel %vm1038, %v1234, %v1280
        %v1282 = vsel %vm1040, %v1243, %v1281
        %v1283 = vsel %vm1042, %v1252, %v1282
        %v1284 = vsel %vm1044, %v1261, %v1283
        %v1285 = vsel %vm1046, %v1270, %v1284
        %v1286 = vsel %vm1048, %v1279, %v1285
        %v1288 = vsel %vm1051, %v1286, 0.0
        %1289 = vadd.xlane.f32.xlu0 %v1288
        %v1290 = vpop.xlane.xlu0 %1289
        %v1291 = vrcp.pop %v1290
        %v1292 = vmul.f32 %v1290, %v1291
        %v1293 = vsub.f32 2.0, %v1292
        %v1294 = vmul.f32 %v1291, %v1293
        %v1296 = vlaneseq
        %v1297 = vshrl.u32 %v1296, 7
        %v1298 = vsub.s32 0, %v1297
        %v1299 = vrot.slane %v1294, %v1298
        %v1300 = vlaneseq
        %v1301 = vshrl.u32 %v1300, 7
        %v1302 = vsub.s32 1, %v1301
        %v1303 = vrot.slane %v1294, %v1302
        %v1304 = vlaneseq
        %v1305 = vshrl.u32 %v1304, 7
        %v1306 = vsub.s32 2, %v1305
        %v1307 = vrot.slane %v1294, %v1306
        %v1308 = vlaneseq
        %v1309 = vshrl.u32 %v1308, 7
        %v1310 = vsub.s32 3, %v1309
        %v1311 = vrot.slane %v1294, %v1310
        %v1312 = vlaneseq
        %v1313 = vshrl.u32 %v1312, 7
        %v1314 = vsub.s32 4, %v1313
        %v1315 = vrot.slane %v1294, %v1314
        %v1316 = vlaneseq
        %v1317 = vshrl.u32 %v1316, 7
        %v1318 = vsub.s32 5, %v1317
        %v1319 = vrot.slane %v1294, %v1318
        %v1320 = vlaneseq
        %v1321 = vshrl.u32 %v1320, 7
        %v1322 = vsub.s32 6, %v1321
        %v1323 = vrot.slane %v1294, %v1322
        %v1324 = vlaneseq
        %v1325 = vshrl.u32 %v1324, 7
        %v1326 = vsub.s32 7, %v1325
        %v1327 = vrot.slane %v1294, %v1326
        %v1336 = vmul.f32 %v1113, %v1299
        %v1337 = vmul.f32 %v1115, %v1299
        %v1338 = vmul.f32 %v1117, %v1303
        %v1339 = vmul.f32 %v1119, %v1303
        %v1340 = vmul.f32 %v1121, %v1307
        %v1341 = vmul.f32 %v1123, %v1307
        %v1342 = vmul.f32 %v1125, %v1311
        %v1343 = vmul.f32 %v1127, %v1311
        %v1344 = vmul.f32 %v1129, %v1315
        %v1345 = vmul.f32 %v1131, %v1315
        %v1346 = vmul.f32 %v1133, %v1319
        %v1347 = vmul.f32 %v1135, %v1319
        %v1348 = vmul.f32 %v1137, %v1323
        %v1349 = vmul.f32 %v1139, %v1323
        %v1350 = vmul.f32 %v1141, %v1327
        %v1351 = vmul.f32 %v1143, %v1327
        %1368 = vset.pattern.permute.xlu0 0
        %1369 = vperm.xlu0 %1368, %v1336
        %v1370 = vpop.permute.xlu0 %1369
        %1371 = vset.pattern.permute.xlu0 0
        %1372 = vperm.xlu0 %1371, %v1337
        %v1373 = vpop.permute.xlu0 %1372
        %1374 = vset.pattern.permute.xlu0 0
        %1375 = vperm.xlu0 %1374, %v1338
        %v1376 = vpop.permute.xlu0 %1375
        %1377 = vset.pattern.permute.xlu0 0
        %1378 = vperm.xlu0 %1377, %v1339
        %v1379 = vpop.permute.xlu0 %1378
        %1380 = vset.pattern.permute.xlu0 0
        %1381 = vperm.xlu0 %1380, %v1340
        %v1382 = vpop.permute.xlu0 %1381
        %1383 = vset.pattern.permute.xlu0 0
        %1384 = vperm.xlu0 %1383, %v1341
        %v1385 = vpop.permute.xlu0 %1384
        %1386 = vset.pattern.permute.xlu0 0
        %1387 = vperm.xlu0 %1386, %v1342
        %v1388 = vpop.permute.xlu0 %1387
        %1389 = vset.pattern.permute.xlu0 0
        %1390 = vperm.xlu0 %1389, %v1343
        %v1391 = vpop.permute.xlu0 %1390
        %1392 = vset.pattern.permute.xlu0 0
        %1393 = vperm.xlu0 %1392, %v1344
        %v1394 = vpop.permute.xlu0 %1393
        %1395 = vset.pattern.permute.xlu0 0
        %1396 = vperm.xlu0 %1395, %v1345
        %v1397 = vpop.permute.xlu0 %1396
        %1398 = vset.pattern.permute.xlu0 0
        %1399 = vperm.xlu0 %1398, %v1346
        %v1400 = vpop.permute.xlu0 %1399
        %1401 = vset.pattern.permute.xlu0 0
        %1402 = vperm.xlu0 %1401, %v1347
        %v1403 = vpop.permute.xlu0 %1402
        %1404 = vset.pattern.permute.xlu0 0
        %1405 = vperm.xlu0 %1404, %v1348
        %v1406 = vpop.permute.xlu0 %1405
        %1407 = vset.pattern.permute.xlu0 0
        %1408 = vperm.xlu0 %1407, %v1349
        %v1409 = vpop.permute.xlu0 %1408
        %1410 = vset.pattern.permute.xlu0 0
        %1411 = vperm.xlu0 %1410, %v1350
        %v1412 = vpop.permute.xlu0 %1411
        %1413 = vset.pattern.permute.xlu0 0
        %1414 = vperm.xlu0 %1413, %v1351
        %v1415 = vpop.permute.xlu0 %1414
        %v1416 = vlaneseq
        %v1417 = vshrl.u32 %v1416, 7
        %v1418 = vsub.s32 %v961, %v1417
        %v1419 = vrot.slane %v1370, %v1418
        %v1420 = vlaneseq
        %v1421 = vshrl.u32 %v1420, 7
        %v1422 = vsub.s32 %v966, %v1421
        %v1423 = vrot.slane %v1373, %v1422
        %v1424 = vsel %vm971, %v1423, %v1419
        %v1425 = vlaneseq
        %v1426 = vshrl.u32 %v1425, 7
        %v1427 = vsub.s32 %v961, %v1426
        %v1428 = vrot.slane %v1376, %v1427
        %v1429 = vlaneseq
        %v1430 = vshrl.u32 %v1429, 7
        %v1431 = vsub.s32 %v966, %v1430
        %v1432 = vrot.slane %v1379, %v1431
        %v1433 = vsel %vm971, %v1432, %v1428
        %v1434 = vlaneseq
        %v1435 = vshrl.u32 %v1434, 7
        %v1436 = vsub.s32 %v961, %v1435
        %v1437 = vrot.slane %v1382, %v1436
        %v1438 = vlaneseq
        %v1439 = vshrl.u32 %v1438, 7
        %v1440 = vsub.s32 %v966, %v1439
        %v1441 = vrot.slane %v1385, %v1440
        %v1442 = vsel %vm971, %v1441, %v1437
        %v1443 = vlaneseq
        %v1444 = vshrl.u32 %v1443, 7
        %v1445 = vsub.s32 %v961, %v1444
        %v1446 = vrot.slane %v1388, %v1445
        %v1447 = vlaneseq
        %v1448 = vshrl.u32 %v1447, 7
        %v1449 = vsub.s32 %v966, %v1448
        %v1450 = vrot.slane %v1391, %v1449
        %v1451 = vsel %vm971, %v1450, %v1446
        %v1452 = vlaneseq
        %v1453 = vshrl.u32 %v1452, 7
        %v1454 = vsub.s32 %v961, %v1453
        %v1455 = vrot.slane %v1394, %v1454
        %v1456 = vlaneseq
        %v1457 = vshrl.u32 %v1456, 7
        %v1458 = vsub.s32 %v966, %v1457
        %v1459 = vrot.slane %v1397, %v1458
        %v1460 = vsel %vm971, %v1459, %v1455
        %v1461 = vlaneseq
        %v1462 = vshrl.u32 %v1461, 7
        %v1463 = vsub.s32 %v961, %v1462
        %v1464 = vrot.slane %v1400, %v1463
        %v1465 = vlaneseq
        %v1466 = vshrl.u32 %v1465, 7
        %v1467 = vsub.s32 %v966, %v1466
        %v1468 = vrot.slane %v1403, %v1467
        %v1469 = vsel %vm971, %v1468, %v1464
        %v1470 = vlaneseq
        %v1471 = vshrl.u32 %v1470, 7
        %v1472 = vsub.s32 %v961, %v1471
        %v1473 = vrot.slane %v1406, %v1472
        %v1474 = vlaneseq
        %v1475 = vshrl.u32 %v1474, 7
        %v1476 = vsub.s32 %v966, %v1475
        %v1477 = vrot.slane %v1409, %v1476
        %v1478 = vsel %vm971, %v1477, %v1473
        %v1479 = vlaneseq
        %v1480 = vshrl.u32 %v1479, 7
        %v1481 = vsub.s32 %v961, %v1480
        %v1482 = vrot.slane %v1412, %v1481
        %v1483 = vlaneseq
        %v1484 = vshrl.u32 %v1483, 7
        %v1485 = vsub.s32 %v966, %v1484
        %v1486 = vrot.slane %v1415, %v1485
        %v1487 = vsel %vm971, %v1486, %v1482
        %v1488 = vsel %vm1036, %v1433, %v1424
        %v1489 = vsel %vm1038, %v1442, %v1488
        %v1490 = vsel %vm1040, %v1451, %v1489
        %v1491 = vsel %vm1042, %v1460, %v1490
        %v1492 = vsel %vm1044, %v1469, %v1491
        %v1493 = vsel %vm1046, %v1478, %v1492
        %v1494 = vsel %vm1048, %v1487, %v1493
        %v1496 = vsel %vm1051, %v1494, 0.0
        %1497 = vst [vmem:[%s422] sm:$0xff] %v1496
        %v1498 = vunpack.c.l.bf16 %v432
        %v1499 = vunpack.c.l.bf16 %v433
        %v1500 = vunpack.c.l.bf16 %v434
        %v1501 = vunpack.c.l.bf16 %v435
        %v1502 = vunpack.c.l.bf16 %v436
        %v1503 = vunpack.c.l.bf16 %v437
        %v1504 = vunpack.c.l.bf16 %v438
        %v1505 = vunpack.c.l.bf16 %v439
        %v1506 = vunpack.c.l.bf16 %v440
        %v1507 = vunpack.c.l.bf16 %v441
        %v1508 = vunpack.c.l.bf16 %v442
        %v1509 = vunpack.c.l.bf16 %v443
        %v1510 = vunpack.c.l.bf16 %v444
        %v1511 = vunpack.c.l.bf16 %v445
        %v1512 = vunpack.c.l.bf16 %v446
        %v1513 = vunpack.c.l.bf16 %v447
        %v1530 = vmul.f32 %v1498, %v1370
        %v1531 = vmul.f32 %v1499, %v1373
        %v1532 = vmul.f32 %v1500, %v1376
        %v1533 = vmul.f32 %v1501, %v1379
        %v1534 = vmul.f32 %v1502, %v1382
        %v1535 = vmul.f32 %v1503, %v1385
        %v1536 = vmul.f32 %v1504, %v1388
        %v1537 = vmul.f32 %v1505, %v1391
        %v1538 = vmul.f32 %v1506, %v1394
        %v1539 = vmul.f32 %v1507, %v1397
        %v1540 = vmul.f32 %v1508, %v1400
        %v1541 = vmul.f32 %v1509, %v1403
        %v1542 = vmul.f32 %v1510, %v1406
        %v1543 = vmul.f32 %v1511, %v1409
        %v1544 = vmul.f32 %v1512, %v1412
        %v1545 = vmul.f32 %v1513, %v1415
        %v1546 = vadd.f32 %v1530, %v1531
        %v1547 = vrot.slane %v1546, 4
        %v1548 = vadd.f32 %v1546, %v1547
        %v1549 = vrot.slane %v1548, 2
        %v1550 = vadd.f32 %v1548, %v1549
        %v1551 = vrot.slane %v1550, 1
        %v1552 = vadd.f32 %v1550, %v1551
        %v1553 = vadd.f32 %v1532, %v1533
        %v1554 = vrot.slane %v1553, 4
        %v1555 = vadd.f32 %v1553, %v1554
        %v1556 = vrot.slane %v1555, 2
        %v1557 = vadd.f32 %v1555, %v1556
        %v1558 = vrot.slane %v1557, 1
        %v1559 = vadd.f32 %v1557, %v1558
        %v1560 = vadd.f32 %v1534, %v1535
        %v1561 = vrot.slane %v1560, 4
        %v1562 = vadd.f32 %v1560, %v1561
        %v1563 = vrot.slane %v1562, 2
        %v1564 = vadd.f32 %v1562, %v1563
        %v1565 = vrot.slane %v1564, 1
        %v1566 = vadd.f32 %v1564, %v1565
        %v1567 = vadd.f32 %v1536, %v1537
        %v1568 = vrot.slane %v1567, 4
        %v1569 = vadd.f32 %v1567, %v1568
        %v1570 = vrot.slane %v1569, 2
        %v1571 = vadd.f32 %v1569, %v1570
        %v1572 = vrot.slane %v1571, 1
        %v1573 = vadd.f32 %v1571, %v1572
        %v1574 = vadd.f32 %v1538, %v1539
        %v1575 = vrot.slane %v1574, 4
        %v1576 = vadd.f32 %v1574, %v1575
        %v1577 = vrot.slane %v1576, 2
        %v1578 = vadd.f32 %v1576, %v1577
        %v1579 = vrot.slane %v1578, 1
        %v1580 = vadd.f32 %v1578, %v1579
        %v1581 = vadd.f32 %v1540, %v1541
        %v1582 = vrot.slane %v1581, 4
        %v1583 = vadd.f32 %v1581, %v1582
        %v1584 = vrot.slane %v1583, 2
        %v1585 = vadd.f32 %v1583, %v1584
        %v1586 = vrot.slane %v1585, 1
        %v1587 = vadd.f32 %v1585, %v1586
        %v1588 = vadd.f32 %v1542, %v1543
        %v1589 = vrot.slane %v1588, 4
        %v1590 = vadd.f32 %v1588, %v1589
        %v1591 = vrot.slane %v1590, 2
        %v1592 = vadd.f32 %v1590, %v1591
        %v1593 = vrot.slane %v1592, 1
        %v1594 = vadd.f32 %v1592, %v1593
        %v1595 = vadd.f32 %v1544, %v1545
        %v1596 = vrot.slane %v1595, 4
        %v1597 = vadd.f32 %v1595, %v1596
        %v1598 = vrot.slane %v1597, 2
        %v1599 = vadd.f32 %v1597, %v1598
        %v1600 = vrot.slane %v1599, 1
        %v1601 = vadd.f32 %v1599, %v1600
        %v1610 = vsel %vm1036, %v1559, %v1552
        %v1611 = vsel %vm1038, %v1566, %v1610
        %v1612 = vsel %vm1040, %v1573, %v1611
        %v1613 = vsel %vm1042, %v1580, %v1612
        %v1614 = vsel %vm1044, %v1587, %v1613
        %v1615 = vsel %vm1046, %v1594, %v1614
        %v1616 = vsel %vm1048, %v1601, %v1615
        %1618 = vst [vmem:[%s429] sm:$0xff] %v1616
        %s1619 = sand.u32 %s221, 1
        %s1620 = scalar_lea.sflag [#allocation5], %s1619
        %s1621 = sand.u32 %s221, 1
        %s1622 = smul.addr %s1621, 8
        %s1623 = scalar_lea.vmem [#allocation11], %s1622
        %s1624 = sand.u32 %s247, 1
        %s1625 = scalar_lea.sflag [#allocation13], %s1624
        %s1626 = sand.u32 %s247, 1
        %s1627 = smul.addr %s1626, 8
        %s1628 = scalar_lea.vmem [#allocation12], %s1627
        // Predicated region
        $region69: #{tpu_custom_call.1} parent=51 // pred_check
          %p1629 = pneg %p231
        $region70: #{tpu_custom_call.1} parent=51 // pred_check_branch
          %1631 = sbr.rel (%p1629) target = $region72
        $region71: #{tpu_custom_call.1} parent=51 // pred_region
          %s1633 = ssub.s32 128, 128
          %1634 = vsyncadd %s1620, %s1633
          %s1635 = smul.addr %s35, 128
          %s1636 = scalar_lea.hbm %s8, %s1635
          %s1638 = sshll.u32 %s1623, 4
          %s1639 = int_to_ptr.vmem [resolvable:$true] %s1638
          %1641 = dma.vmem_to_hbm [thread:$0]  %s1639, 128, %s1636, %s1620
        $region72: #{tpu_custom_call.1} parent=51 // pred_fallthru
          _
        // Predicated region
        $region73: #{tpu_custom_call.1} parent=51 // pred_check
          %p1642 = pneg %p257
        $region74: #{tpu_custom_call.1} parent=51 // pred_check_branch
          %1644 = sbr.rel (%p1642) target = $region76
        $region75: #{tpu_custom_call.1} parent=51 // pred_region
          %s1646 = ssub.s32 128, 128
          %1647 = vsyncadd %s1625, %s1646
          %s1648 = smul.addr %s35, 128
          %s1649 = scalar_lea.hbm %s9, %s1648
          %s1651 = sshll.u32 %s1628, 4
          %s1652 = int_to_ptr.vmem [resolvable:$true] %s1651
          %1654 = dma.vmem_to_hbm [thread:$0]  %s1652, 128, %s1649, %s1625
        $region76: #{tpu_custom_call.1} parent=51 // pred_fallthru
          _
      $region52: #{tpu_custom_call.1} parent=5 // pred_fallthru
        _
      %p1655 = scmp.le.s32.totalorder 2, %s30
      // Predicated region
      $region77: #{tpu_custom_call.1} parent=5 // pred_check
        %p1656 = pneg %p1655
      $region78: #{tpu_custom_call.1} parent=5 // pred_check_branch
        %1658 = sbr.rel (%p1656) target = $region80
      $region79: #{tpu_custom_call.1} parent=5 // pred_region
        %s1659 = ssub.s32 %s30, 2
        // Predicated region
        $region81: #{tpu_custom_call.1} parent=79 // pred_check
          %p1660 = pneg %p237
        $region82: #{tpu_custom_call.1} parent=79 // pred_check_branch
          %1662 = sbr.rel (%p1660) target = $region84
        $region83: #{tpu_custom_call.1} parent=79 // pred_region
          %s1663 = sand.u32 %s222, 1
          %s1664 = scalar_lea.sflag [#allocation5], %s1663
          %s1665 = sand.u32 %s222, 1
          %s1666 = smul.addr %s1665, 8
          %s1667 = scalar_lea.vmem [#allocation11], %s1666
          %1668 = dma.done %s1664, 128
        $region84: #{tpu_custom_call.1} parent=79 // pred_fallthru
          _
        // Predicated region
        $region85: #{tpu_custom_call.1} parent=79 // pred_check
          %p1669 = pneg %p263
        $region86: #{tpu_custom_call.1} parent=79 // pred_check_branch
          %1671 = sbr.rel (%p1669) target = $region88
        $region87: #{tpu_custom_call.1} parent=79 // pred_region
          %s1672 = sand.u32 %s248, 1
          %s1673 = scalar_lea.sflag [#allocation13], %s1672
          %s1674 = sand.u32 %s248, 1
          %s1675 = smul.addr %s1674, 8
          %s1676 = scalar_lea.vmem [#allocation12], %s1675
          %1677 = dma.done %s1673, 128
        $region88: #{tpu_custom_call.1} parent=79 // pred_fallthru
          _
      $region80: #{tpu_custom_call.1} parent=5 // pred_fallthru
        _
    $region6: #{tpu_custom_call.1} parent=1 // loop_footer
      %s34 = sadd.s32 1, %s30
    $region7: #{tpu_custom_call.1} parent=1 // loop_footer_branch
      %29 = sbr.rel target = $region3
    $region8: #{tpu_custom_call.1} parent=1 // loop_exit
      _
    %1678 = vsyncpa [#allocation4], 1
    %s1679 = scalar_lea.sflag [#allocation4], 1
    %1680 = vsyncpa %s1679, 1
    %1681 = vsyncpa [#allocation7], 1
    %s1682 = scalar_lea.sflag [#allocation7], 1
    %1683 = vsyncpa %s1682, 1
    %1684 = vsyncpa [#allocation10], 1
    %1685 = vsyncpa [#allocation5], 1
    %s1686 = scalar_lea.sflag [#allocation5], 1
    %1687 = vsyncpa %s1686, 1
    %1688 = vsyncpa [#allocation13], 1
    %s1689 = scalar_lea.sflag [#allocation13], 1
    %1690 = vsyncpa %s1689, 1

</llo_original>
